<compile_context>
chip_gen: v6e
topology: v6e:2x2x1
jax: 0.10.0
libtpu: 0.0.40
codegen_flags: <defaults>
</compile_context>

<pallas_src>
import functools

import jax
import jax.numpy as jnp
from jax import lax
from jax.experimental import pallas as pl
from jax.experimental.pallas import tpu as pltpu

_EPS = 1e-4  # pytorch3d compositing kEpsilon


def _round_up(x, m):
    return ((x + m - 1) // m) * m


def _norm_weighted_kernel(lo_ref, hi_ref, idx_ref, alpha_ref, feat_ref, bg_ref,
                          out_ref, acc_ref, *, apply_bg, k_pts, tile_p, use_bf16):
    # lo_ref/hi_ref: (N, nT) int32 SMEM  first/last point-tile touched by this pixel tile
    # idx_ref:   (K, T)  int32  point indices per pixel (z-sorted, -1 == no point)
    # alpha_ref: (K, T)  f32    per-point alphas
    # feat_ref:  (C, TP) f32/bf16  feature tile for the current block of points
    # bg_ref:    (C, 1)  f32    background color
    # out_ref:   (C, T)  f32    composited features (lane-dense)
    # acc_ref:   (C, T)  f32    VMEM accumulator across point tiles
    n = pl.program_id(0)
    t = pl.program_id(1)
    p = pl.program_id(2)
    p_last = pl.num_programs(2) - 1
    T = idx_ref.shape[1]

    @pl.when(p == 0)
    def _():
        acc_ref[...] = jnp.zeros_like(acc_ref)

    # Skip point tiles this pixel tile never references (scalar-prefetched range).
    active = jnp.logical_and(p >= lo_ref[n, t], p <= hi_ref[n, t])

    @pl.when(active)
    def _():
        # Local point ids within this P tile; out-of-tile / invalid (-1) indices
        # match nothing, so no validity mask is needed here.
        idx_local = idx_ref[...] - p * tile_p                  # (K, T)
        w = alpha_ref[...]                                     # (K, T) f32
        if use_bf16:
            w = w.astype(jnp.bfloat16)
        point_ids = lax.broadcasted_iota(jnp.int32, (tile_p, T), 0)   # (TP, T)

        # One-hot weighted scatter matrix, initialized with the k=0 term.
        wmat = jnp.where(point_ids == idx_local[0:1, :], w[0:1, :], 0.0)
        for k in range(1, k_pts):  # K is small and static
            wmat = wmat + jnp.where(point_ids == idx_local[k:k + 1, :], w[k:k + 1, :], 0.0)

        # (C, TP) @ (TP, T) -> (C, T): gather + weighted sum on the MXU.
        acc_ref[...] += jnp.dot(feat_ref[...], wmat,
                                preferred_element_type=jnp.float32)

    @pl.when(p == p_last)
    def _():
        idx = idx_ref[...]
        wm = jnp.where(idx >= 0, alpha_ref[...], 0.0)          # mask only for denom
        denom = jnp.maximum(jnp.sum(wm, axis=0, keepdims=True), _EPS)   # (1, T)
        inv = pl.reciprocal(denom)          # exact: keeps 1e-5 parity with reference
        out = acc_ref[...] * inv            # (C, T)
        if apply_bg:
            out = jnp.where(idx[0:1, :] < 0, bg_ref[...], out)
        out_ref[...] = out.astype(out_ref.dtype)


def norm_weighted_compositor(fragments, alphas, ptclds, background_color=None,
                             tile_pixels=1024, tile_points=256, use_bf16=False):
    """Forward pass of NormWeightedCompositor.

    fragments: (N, K, H, W) int32, alphas: (N, K, H, W) f32, ptclds: (C, P) f32.
    Returns (N, C, H, W) f32.
    """
    N, K, H, W = fragments.shape
    C, P = ptclds.shape
    HW = H * W

    # Lane-dense pixel tile: multiple of 128; pad the (flattened) image if needed.
    T = min(_round_up(tile_pixels, 128), _round_up(HW, 128))
    # Megacore (v7x has 2 TCs): make sure the parallel axes have >= 2 programs.
    if N * ((HW + T - 1) // T) < 2 and HW > 128:
        T = _round_up((HW + 1) // 2, 128)
    HW_pad = _round_up(HW, T)
    nT = HW_pad // T

    # Point tile: multiple of 128; zero-pad the feature table so TP | P_pad.
    # Kept small (<=256 by default): MXU is ~3% utilized at C=4 anyway and a
    # small TP minimizes the (TP, T) one-hot temp's VMEM traffic/footprint.
    TP = min(_round_up(tile_points, 128), _round_up(P, 128))
    P_pad = _round_up(P, TP)
    nP = P_pad // TP

    # Channel/K-major layout: free reshapes of the NCHW-style inputs (no transposes).
    idx = fragments.reshape(N, K, HW).astype(jnp.int32)
    alp = alphas.reshape(N, K, HW).astype(jnp.float32)
    if HW_pad != HW:
        idx = jnp.pad(idx, ((0, 0), (0, 0), (0, HW_pad - HW)), constant_values=-1)
        alp = jnp.pad(alp, ((0, 0), (0, 0), (0, HW_pad - HW)))
    feat_dtype = jnp.bfloat16 if use_bf16 else jnp.float32
    feat = ptclds.astype(feat_dtype)                       # (C, P)
    if P_pad != P:
        feat = jnp.pad(feat, ((0, 0), (0, P_pad - P)))     # padded points never indexed

    # Per (image, pixel-tile) point-index range -> which point tiles to visit.
    # Cheap XLA reduction; lands in SMEM via scalar prefetch.
    idx4 = idx.reshape(N, K, nT, T)
    valid4 = idx4 >= 0
    min_idx = jnp.where(valid4, idx4, jnp.int32(1 << 30)).min(axis=(1, 3))   # (N, nT)
    max_idx = jnp.where(valid4, idx4, jnp.int32(-1)).max(axis=(1, 3))        # (N, nT)
    any_valid = max_idx >= 0
    lo_tile = jnp.where(any_valid, min_idx // TP, 0)
    hi_tile = jnp.where(any_valid, max_idx // TP, 0)
    lo_tile = jnp.clip(lo_tile, 0, nP - 1).astype(jnp.int32)
    hi_tile = jnp.clip(hi_tile, 0, nP - 1).astype(jnp.int32)

    apply_bg = background_color is not None
    if apply_bg:
        bg = jnp.asarray(background_color, dtype=jnp.float32).reshape(-1)
        if bg.shape[0] == 3 and C == 4:
            bg = jnp.concatenate([bg, jnp.ones((1,), jnp.float32)])
        if bg.shape[0] != C:
            raise ValueError(f"background color has {bg.shape[0]} channels not {C}")
    else:
        bg = jnp.zeros((C,), jnp.float32)
    bg = bg.reshape(C, 1)

    grid = (N, nT, nP)  # reduction (points) axis innermost

    out = pl.pallas_call(
        functools.partial(_norm_weighted_kernel, apply_bg=apply_bg, k_pts=K,
                          tile_p=TP, use_bf16=use_bf16),
        out_shape=jax.ShapeDtypeStruct((N, C, HW_pad), jnp.float32),
        grid_spec=pltpu.PrefetchScalarGridSpec(
            num_scalar_prefetch=2,
            grid=grid,
            in_specs=[
                pl.BlockSpec((pl.Squeezed(), K, T),
                             lambda n, t, p, lo, hi: (n, 0, t)),                 # idx
                pl.BlockSpec((pl.Squeezed(), K, T),
                             lambda n, t, p, lo, hi: (n, 0, t)),                 # alphas
                # Clamp the point-tile index into the referenced range so the
                # feat DMA is not re-issued on skipped steps.
                pl.BlockSpec((C, TP),
                             lambda n, t, p, lo, hi:
                             (0, jnp.clip(p, lo[n, t], hi[n, t]))),              # features
                pl.BlockSpec((C, 1), lambda n, t, p, lo, hi: (0, 0)),            # background
            ],
            out_specs=pl.BlockSpec((pl.Squeezed(), C, T),
                                   lambda n, t, p, lo, hi: (n, 0, t)),
            scratch_shapes=[pltpu.VMEM((C, T), jnp.float32)],
        ),
        compiler_params=pltpu.CompilerParams(
            dimension_semantics=("parallel", "parallel", "arbitrary"),
            vmem_limit_bytes=32 * 1024 * 1024),
    )(lo_tile, hi_tile, idx, alp, feat, bg)

    if HW_pad != HW:
        out = out[:, :, :HW]
    return out.reshape(N, C, H, W)


def _reference(fragments, alphas, ptclds, background_color=None):
    """Pure-JAX reference with identical semantics."""
    N, K, H, W = fragments.shape
    C, P = ptclds.shape
    valid = fragments >= 0                                      # (N,K,H,W)
    w = jnp.where(valid, alphas, 0.0)
    denom = jnp.maximum(w.sum(axis=1, keepdims=True), _EPS)     # (N,1,H,W)
    idx_safe = jnp.where(valid, fragments, 0)
    feats = ptclds[:, idx_safe]                                 # (C,N,K,H,W)
    feats = jnp.where(valid[None], feats, 0.0)
    img = (feats * w[None]).sum(axis=2)                         # (C,N,H,W)
    img = jnp.transpose(img, (1, 0, 2, 3)) / denom              # (N,C,H,W)
    if background_color is not None:
        bg = jnp.asarray(background_color, dtype=jnp.float32).reshape(-1)
        if bg.shape[0] == 3 and C == 4:
            bg = jnp.concatenate([bg, jnp.ones((1,), jnp.float32)])
        mask = fragments[:, 0] < 0                              # (N,H,W)
        img = jnp.where(mask[:, None], bg[None, :, None, None], img)
    return img


def _make_inputs(key, N, K, H, W, C, P, lo=0):
    k_feat, k_idx, k_cnt, k_alpha = jax.random.split(key, 4)
    ptclds = jax.random.uniform(k_feat, (C, P), dtype=jnp.float32)          # (C, P)
    raw_idx = jax.random.randint(k_idx, (N, K, H, W), lo, P, dtype=jnp.int32)
    num_valid = jax.random.randint(k_cnt, (N, 1, H, W), 0, K + 1, dtype=jnp.int32)
    karange = jnp.arange(K, dtype=jnp.int32).reshape(1, K, 1, 1)
    fragments = jnp.where(karange < num_valid, raw_idx, -1)                 # valid first (z-sorted)
    alphas = jax.random.uniform(k_alpha, (N, K, H, W), dtype=jnp.float32)
    return fragments, alphas, ptclds


if __name__ == "__main__":
    key = jax.random.PRNGKey(0)
    k1, k2, k3 = jax.random.split(key, 3)

    # Case 1: aligned shapes, with background color (3-channel -> alpha appended).
    N, K, H, W, C, P = 2, 8, 16, 16, 4, 128
    fragments, alphas, ptclds = _make_inputs(k1, N, K, H, W, C, P)
    background_color = (0.2, 0.5, 0.8)

    out = jax.block_until_ready(
        norm_weighted_compositor(fragments, alphas, ptclds, background_color))
    ref = _reference(fragments, alphas, ptclds, background_color)
    assert out.shape == (N, C, H, W), out.shape
    assert jnp.allclose(out, ref, atol=1e-5, rtol=1e-5), float(jnp.max(jnp.abs(out - ref)))

    # No-background path.
    out_nobg = jax.block_until_ready(norm_weighted_compositor(fragments, alphas, ptclds, None))
    ref_nobg = _reference(fragments, alphas, ptclds, None)
    assert jnp.allclose(out_nobg, ref_nobg, atol=1e-5, rtol=1e-5)

    # Optional bf16 fast path (v6e/v7x) — relaxed tolerance by design.
    out_bf16 = jax.block_until_ready(
        norm_weighted_compositor(fragments, alphas, ptclds, background_color, use_bf16=True))
    assert jnp.allclose(out_bf16, ref, atol=5e-2, rtol=5e-2), \
        float(jnp.max(jnp.abs(out_bf16 - ref)))

    # Case 2: unaligned HW (pixel padding) and P tiled across two grid steps.
    N2, K2, H2, W2, C2, P2 = 1, 8, 10, 10, 4, 200
    fragments2, alphas2, ptclds2 = _make_inputs(k2, N2, K2, H2, W2, C2, P2)
    out2 = jax.block_until_ready(
        norm_weighted_compositor(fragments2, alphas2, ptclds2, (0.1, 0.3, 0.7),
                                 tile_pixels=128, tile_points=128))
    ref2 = _reference(fragments2, alphas2, ptclds2, (0.1, 0.3, 0.7))
    assert out2.shape == (N2, C2, H2, W2), out2.shape
    assert jnp.allclose(out2, ref2, atol=1e-5, rtol=1e-5), float(jnp.max(jnp.abs(out2 - ref2)))

    # Case 3: indices confined to the upper half of the point range — exercises
    # point-tile skipping (lo_tile > 0), the clamped feature index_map, a
    # 3-channel feature table, and the megacore pixel-tile split (N=1).
    N3, K3, H3, W3, C3, P3 = 1, 4, 16, 24, 3, 512
    fragments3, alphas3, ptclds3 = _make_inputs(k3, N3, K3, H3, W3, C3, P3, lo=P3 // 2)
    out3 = jax.block_until_ready(
        norm_weighted_compositor(fragments3, alphas3, ptclds3, (0.9, 0.1, 0.4),
                                 tile_points=128))
    ref3 = _reference(fragments3, alphas3, ptclds3, (0.9, 0.1, 0.4))
    assert out3.shape == (N3, C3, H3, W3), out3.shape
    assert jnp.allclose(out3, ref3, atol=1e-5, rtol=1e-5), float(jnp.max(jnp.abs(out3 - ref3)))

    print("KERNEL_OK")
</pallas_src>

<mosaic_0001>
module attributes {stable_mosaic.version = 11 : i64} {
  func.func @_norm_weighted_kernel(%arg0: i32, %arg1: i32, %arg2: i32, %arg3: memref<2x1xi32, #tpu.memory_space<smem>>, %arg4: memref<2x1xi32, #tpu.memory_space<smem>>, %arg5: memref<1x8x256xi32, #tpu.memory_space<vmem>>, %arg6: memref<1x8x256xf32, #tpu.memory_space<vmem>>, %arg7: memref<4x128xf32, #tpu.memory_space<vmem>>, %arg8: memref<4x1xf32, #tpu.memory_space<vmem>>, %arg9: memref<1x4x256xf32, #tpu.memory_space<vmem>>, %arg10: memref<4x256xf32, #tpu.memory_space<vmem>>) attributes {dimension_semantics = [#tpu.dimension_semantics<parallel>, #tpu.dimension_semantics<parallel>, #tpu.dimension_semantics<arbitrary>], iteration_bounds = array<i64: 2, 1, 1>, scalar_prefetch = 2 : i64, scratch_operands = 1 : i64, tpu.core_type = #tpu.core_type<tc>, window_params = [{transform_indices = @transform_0, window_bounds = array<i64: 1, 8, 256>}, {transform_indices = @transform_1, window_bounds = array<i64: 1, 8, 256>}, {transform_indices = @transform_2, window_bounds = array<i64: 4, 128>}, {pipeline_mode = #tpu.pipeline_mode<synchronous>, transform_indices = @transform_3, window_bounds = array<i64: 4, 1>}, {transform_indices = @transform_4, window_bounds = array<i64: 1, 4, 256>}]} {
    %c0_i32 = arith.constant 0 : i32
    %0 = arith.cmpi eq, %arg2, %c0_i32 : i32
    %1 = arith.extui %0 : i1 to i32
    %c0_i32_0 = arith.constant 0 : i32
    %2 = arith.cmpi ne, %1, %c0_i32_0 : i32
    scf.if %2 {
      %cst = arith.constant 0.000000e+00 : f32
      %17 = vector.broadcast %cst : f32 to vector<4x256xf32>
      %c0 = arith.constant 0 : index
      %c0_4 = arith.constant 0 : index
      %18 = vector.load %arg10[%c0, %c0_4] : memref<4x256xf32, #tpu.memory_space<vmem>>, vector<4x256xf32>
      tpu.vector_store %arg10[%c0, %c0_4], %17 {strides = array<i32>} : memref<4x256xf32, #tpu.memory_space<vmem>>, vector<4x256xf32>,
    } else {
    }
    %3 = arith.index_cast %arg0 : i32 to index
    %4 = arith.index_cast %arg1 : i32 to index
    %5 = memref.load %arg3[%3, %4] : memref<2x1xi32, #tpu.memory_space<smem>>
    %6 = arith.cmpi sge, %arg2, %5 : i32
    %7 = arith.index_cast %arg0 : i32 to index
    %8 = arith.index_cast %arg1 : i32 to index
    %9 = memref.load %arg4[%7, %8] : memref<2x1xi32, #tpu.memory_space<smem>>
    %10 = arith.cmpi sle, %arg2, %9 : i32
    %11 = arith.andi %6, %10 : i1
    %12 = arith.extui %11 : i1 to i32
    %c0_i32_1 = arith.constant 0 : i32
    %13 = arith.cmpi ne, %12, %c0_i32_1 : i32
    scf.if %13 {
      %c0 = arith.constant 0 : index
      %c0_4 = arith.constant 0 : index
      %c0_5 = arith.constant 0 : index
      %17 = vector.load %arg5[%c0, %c0_4, %c0_5] : memref<1x8x256xi32, #tpu.memory_space<vmem>>, vector<1x8x256xi32>
      %18 = vector.shape_cast %17 : vector<1x8x256xi32> to vector<8x256xi32>
      %c128_i32 = arith.constant 128 : i32
      %19 = arith.muli %arg2, %c128_i32 : i32
      %20 = vector.broadcast %19 : i32 to vector<8x256xi32>
      %21 = arith.subi %18, %20 : vector<8x256xi32>
      %c0_6 = arith.constant 0 : index
      %c0_7 = arith.constant 0 : index
      %c0_8 = arith.constant 0 : index
      %22 = vector.load %arg6[%c0_6, %c0_7, %c0_8] : memref<1x8x256xf32, #tpu.memory_space<vmem>>, vector<1x8x256xf32>
      %23 = vector.shape_cast %22 : vector<1x8x256xf32> to vector<8x256xf32>
      %24 = tpu.iota {dimensions = array<i32: 0>} : vector<128x256xi32>
      %25 = vector.extract_strided_slice %21 {offsets = [0, 0], sizes = [1, 256], strides = [1, 1]} : vector<8x256xi32> to vector<1x256xi32>
      %26 = vector.broadcast %25 : vector<1x256xi32> to vector<128x256xi32>
      %27 = arith.cmpi eq, %24, %26 : vector<128x256xi32>
      %28 = vector.extract_strided_slice %23 {offsets = [0, 0], sizes = [1, 256], strides = [1, 1]} : vector<8x256xf32> to vector<1x256xf32>
      %cst = arith.constant 0.000000e+00 : f32
      %29 = vector.shape_cast %28 : vector<1x256xf32> to vector<1x256xf32>
      %30 = vector.broadcast %29 : vector<1x256xf32> to vector<128x256xf32>
      %31 = vector.broadcast %cst : f32 to vector<128x256xf32>
      %32 = arith.select %27, %30, %31 : vector<128x256xi1>, vector<128x256xf32>
      %33 = vector.extract_strided_slice %21 {offsets = [1, 0], sizes = [1, 256], strides = [1, 1]} : vector<8x256xi32> to vector<1x256xi32>
      %34 = vector.broadcast %33 : vector<1x256xi32> to vector<128x256xi32>
      %35 = arith.cmpi eq, %24, %34 : vector<128x256xi32>
      %36 = vector.extract_strided_slice %23 {offsets = [1, 0], sizes = [1, 256], strides = [1, 1]} : vector<8x256xf32> to vector<1x256xf32>
      %cst_9 = arith.constant 0.000000e+00 : f32
      %37 = vector.shape_cast %36 : vector<1x256xf32> to vector<1x256xf32>
      %38 = vector.broadcast %37 : vector<1x256xf32> to vector<128x256xf32>
      %39 = vector.broadcast %cst_9 : f32 to vector<128x256xf32>
      %40 = arith.select %35, %38, %39 : vector<128x256xi1>, vector<128x256xf32>
      %41 = arith.addf %32, %40 : vector<128x256xf32>
      %42 = vector.extract_strided_slice %21 {offsets = [2, 0], sizes = [1, 256], strides = [1, 1]} : vector<8x256xi32> to vector<1x256xi32>
      %43 = vector.broadcast %42 : vector<1x256xi32> to vector<128x256xi32>
      %44 = arith.cmpi eq, %24, %43 : vector<128x256xi32>
      %45 = vector.extract_strided_slice %23 {offsets = [2, 0], sizes = [1, 256], strides = [1, 1]} : vector<8x256xf32> to vector<1x256xf32>
      %cst_10 = arith.constant 0.000000e+00 : f32
      %46 = vector.shape_cast %45 : vector<1x256xf32> to vector<1x256xf32>
      %47 = vector.broadcast %46 : vector<1x256xf32> to vector<128x256xf32>
      %48 = vector.broadcast %cst_10 : f32 to vector<128x256xf32>
      %49 = arith.select %44, %47, %48 : vector<128x256xi1>, vector<128x256xf32>
      %50 = arith.addf %41, %49 : vector<128x256xf32>
      %51 = vector.extract_strided_slice %21 {offsets = [3, 0], sizes = [1, 256], strides = [1, 1]} : vector<8x256xi32> to vector<1x256xi32>
      %52 = vector.broadcast %51 : vector<1x256xi32> to vector<128x256xi32>
      %53 = arith.cmpi eq, %24, %52 : vector<128x256xi32>
      %54 = vector.extract_strided_slice %23 {offsets = [3, 0], sizes = [1, 256], strides = [1, 1]} : vector<8x256xf32> to vector<1x256xf32>
      %cst_11 = arith.constant 0.000000e+00 : f32
      %55 = vector.shape_cast %54 : vector<1x256xf32> to vector<1x256xf32>
      %56 = vector.broadcast %55 : vector<1x256xf32> to vector<128x256xf32>
      %57 = vector.broadcast %cst_11 : f32 to vector<128x256xf32>
      %58 = arith.select %53, %56, %57 : vector<128x256xi1>, vector<128x256xf32>
      %59 = arith.addf %50, %58 : vector<128x256xf32>
      %60 = vector.extract_strided_slice %21 {offsets = [4, 0], sizes = [1, 256], strides = [1, 1]} : vector<8x256xi32> to vector<1x256xi32>
      %61 = vector.broadcast %60 : vector<1x256xi32> to vector<128x256xi32>
      %62 = arith.cmpi eq, %24, %61 : vector<128x256xi32>
      %63 = vector.extract_strided_slice %23 {offsets = [4, 0], sizes = [1, 256], strides = [1, 1]} : vector<8x256xf32> to vector<1x256xf32>
      %cst_12 = arith.constant 0.000000e+00 : f32
      %64 = vector.shape_cast %63 : vector<1x256xf32> to vector<1x256xf32>
      %65 = vector.broadcast %64 : vector<1x256xf32> to vector<128x256xf32>
      %66 = vector.broadcast %cst_12 : f32 to vector<128x256xf32>
      %67 = arith.select %62, %65, %66 : vector<128x256xi1>, vector<128x256xf32>
      %68 = arith.addf %59, %67 : vector<128x256xf32>
      %69 = vector.extract_strided_slice %21 {offsets = [5, 0], sizes = [1, 256], strides = [1, 1]} : vector<8x256xi32> to vector<1x256xi32>
      %70 = vector.broadcast %69 : vector<1x256xi32> to vector<128x256xi32>
      %71 = arith.cmpi eq, %24, %70 : vector<128x256xi32>
      %72 = vector.extract_strided_slice %23 {offsets = [5, 0], sizes = [1, 256], strides = [1, 1]} : vector<8x256xf32> to vector<1x256xf32>
      %cst_13 = arith.constant 0.000000e+00 : f32
      %73 = vector.shape_cast %72 : vector<1x256xf32> to vector<1x256xf32>
      %74 = vector.broadcast %73 : vector<1x256xf32> to vector<128x256xf32>
      %75 = vector.broadcast %cst_13 : f32 to vector<128x256xf32>
      %76 = arith.select %71, %74, %75 : vector<128x256xi1>, vector<128x256xf32>
      %77 = arith.addf %68, %76 : vector<128x256xf32>
      %78 = vector.extract_strided_slice %21 {offsets = [6, 0], sizes = [1, 256], strides = [1, 1]} : vector<8x256xi32> to vector<1x256xi32>
      %79 = vector.broadcast %78 : vector<1x256xi32> to vector<128x256xi32>
      %80 = arith.cmpi eq, %24, %79 : vector<128x256xi32>
      %81 = vector.extract_strided_slice %23 {offsets = [6, 0], sizes = [1, 256], strides = [1, 1]} : vector<8x256xf32> to vector<1x256xf32>
      %cst_14 = arith.constant 0.000000e+00 : f32
      %82 = vector.shape_cast %81 : vector<1x256xf32> to vector<1x256xf32>
      %83 = vector.broadcast %82 : vector<1x256xf32> to vector<128x256xf32>
      %84 = vector.broadcast %cst_14 : f32 to vector<128x256xf32>
      %85 = arith.select %80, %83, %84 : vector<128x256xi1>, vector<128x256xf32>
      %86 = arith.addf %77, %85 : vector<128x256xf32>
      %87 = vector.extract_strided_slice %21 {offsets = [7, 0], sizes = [1, 256], strides = [1, 1]} : vector<8x256xi32> to vector<1x256xi32>
      %88 = vector.broadcast %87 : vector<1x256xi32> to vector<128x256xi32>
      %89 = arith.cmpi eq, %24, %88 : vector<128x256xi32>
      %90 = vector.extract_strided_slice %23 {offsets = [7, 0], sizes = [1, 256], strides = [1, 1]} : vector<8x256xf32> to vector<1x256xf32>
      %cst_15 = arith.constant 0.000000e+00 : f32
      %91 = vector.shape_cast %90 : vector<1x256xf32> to vector<1x256xf32>
      %92 = vector.broadcast %91 : vector<1x256xf32> to vector<128x256xf32>
      %93 = vector.broadcast %cst_15 : f32 to vector<128x256xf32>
      %94 = arith.select %89, %92, %93 : vector<128x256xi1>, vector<128x256xf32>
      %95 = arith.addf %86, %94 : vector<128x256xf32>
      %c0_16 = arith.constant 0 : index
      %c0_17 = arith.constant 0 : index
      %96 = vector.load %arg10[%c0_16, %c0_17] : memref<4x256xf32, #tpu.memory_space<vmem>>, vector<4x256xf32>
      %c0_18 = arith.constant 0 : index
      %c0_19 = arith.constant 0 : index
      %97 = vector.load %arg7[%c0_18, %c0_19] : memref<4x128xf32, #tpu.memory_space<vmem>>, vector<4x128xf32>
      %cst_20 = arith.constant dense<0.000000e+00> : vector<4x256xf32>
      %98 = tpu.matmul %97, %95, %cst_20 {dimension_numbers = #tpu.dot_dimension_numbers<[1], [0], [0], [1], [0, 0, 1, 1], [], []>} : vector<4x128xf32>, vector<128x256xf32>, vector<4x256xf32> -> vector<4x256xf32>
      %99 = arith.addf %96, %98 : vector<4x256xf32>
      %c0_21 = arith.constant 0 : index
      %c0_22 = arith.constant 0 : index
      %100 = vector.load %arg10[%c0_21, %c0_22] : memref<4x256xf32, #tpu.memory_space<vmem>>, vector<4x256xf32>
      tpu.vector_store %arg10[%c0_21, %c0_22], %99 {strides = array<i32>} : memref<4x256xf32, #tpu.memory_space<vmem>>, vector<4x256xf32>,
    } else {
    }
    %c0_i32_2 = arith.constant 0 : i32
    %14 = arith.cmpi eq, %arg2, %c0_i32_2 : i32
    %15 = arith.extui %14 : i1 to i32
    %c0_i32_3 = arith.constant 0 : i32
    %16 = arith.cmpi ne, %15, %c0_i32_3 : i32
    scf.if %16 {
      %c0 = arith.constant 0 : index
      %c0_4 = arith.constant 0 : index
      %c0_5 = arith.constant 0 : index
      %17 = vector.load %arg5[%c0, %c0_4, %c0_5] : memref<1x8x256xi32, #tpu.memory_space<vmem>>, vector<1x8x256xi32>
      %18 = vector.shape_cast %17 : vector<1x8x256xi32> to vector<8x256xi32>
      %c0_i32_6 = arith.constant 0 : i32
      %19 = vector.broadcast %c0_i32_6 : i32 to vector<8x256xi32>
      %20 = arith.cmpi sge, %18, %19 : vector<8x256xi32>
      %c0_7 = arith.constant 0 : index
      %c0_8 = arith.constant 0 : index
      %c0_9 = arith.constant 0 : index
      %21 = vector.load %arg6[%c0_7, %c0_8, %c0_9] : memref<1x8x256xf32, #tpu.memory_space<vmem>>, vector<1x8x256xf32>
      %22 = vector.shape_cast %21 : vector<1x8x256xf32> to vector<8x256xf32>
      %cst = arith.constant 0.000000e+00 : f32
      %23 = vector.broadcast %cst : f32 to vector<8x256xf32>
      %24 = arith.select %20, %22, %23 : vector<8x256xi1>, vector<8x256xf32>
      %cst_10 = arith.constant dense<0.000000e+00> : vector<256xf32>
      %25 = vector.multi_reduction <add>, %24, %cst_10 [0] : vector<8x256xf32> to vector<256xf32>
      %26 = vector.shape_cast %25 : vector<256xf32> to vector<1x256xf32>
      %cst_11 = arith.constant 9.99999974E-5 : f32
      %27 = vector.broadcast %cst_11 : f32 to vector<1x256xf32>
      %28 = arith.maximumf %26, %27 : vector<1x256xf32>
      %29 = tpu.reciprocal %28 : vector<1x256xf32> -> vector<1x256xf32>
      %c0_12 = arith.constant 0 : index
      %c0_13 = arith.constant 0 : index
      %30 = vector.load %arg10[%c0_12, %c0_13] : memref<4x256xf32, #tpu.memory_space<vmem>>, vector<4x256xf32>
      %31 = vector.broadcast %29 : vector<1x256xf32> to vector<4x256xf32>
      %32 = arith.mulf %30, %31 : vector<4x256xf32>
      %33 = vector.extract_strided_slice %18 {offsets = [0, 0], sizes = [1, 256], strides = [1, 1]} : vector<8x256xi32> to vector<1x256xi32>
      %c0_i32_14 = arith.constant 0 : i32
      %34 = vector.broadcast %c0_i32_14 : i32 to vector<1x256xi32>
      %35 = arith.cmpi slt, %33, %34 : vector<1x256xi32>
      %c0_15 = arith.constant 0 : index
      %c0_16 = arith.constant 0 : index
      %36 = vector.load %arg8[%c0_15, %c0_16] : memref<4x1xf32, #tpu.memory_space<vmem>>, vector<4x1xf32>
      %37 = vector.shape_cast %35 : vector<1x256xi1> to vector<1x256xi1>
      %38 = vector.broadcast %37 : vector<1x256xi1> to vector<4x256xi1>
      %39 = vector.shape_cast %36 : vector<4x1xf32> to vector<4x1xf32>
      %40 = vector.broadcast %39 : vector<4x1xf32> to vector<4x256xf32>
      %41 = arith.select %38, %40, %32 : vector<4x256xi1>, vector<4x256xf32>
      %c0_17 = arith.constant 0 : index
      %c0_18 = arith.constant 0 : index
      %c0_19 = arith.constant 0 : index
      %42 = vector.load %arg9[%c0_17, %c0_18, %c0_19] : memref<1x4x256xf32, #tpu.memory_space<vmem>>, vector<1x4x256xf32>
      %43 = vector.shape_cast %42 : vector<1x4x256xf32> to vector<4x256xf32>
      %44 = vector.shape_cast %41 : vector<4x256xf32> to vector<1x4x256xf32>
      tpu.vector_store %arg9[%c0_17, %c0_18, %c0_19], %44 {strides = array<i32>} : memref<1x4x256xf32, #tpu.memory_space<vmem>>, vector<1x4x256xf32>,
    } else {
    }
    return
  }
  func.func @transform_0(%arg0: i32, %arg1: i32, %arg2: i32, %arg3: memref<2x1xi32, #tpu.memory_space<smem>>, %arg4: memref<2x1xi32, #tpu.memory_space<smem>>) -> (i32, i32, i32) {
    %c0_i32 = arith.constant 0 : i32
    %c0_i32_0 = arith.constant 0 : i32
    return %arg0, %c0_i32, %arg1 : i32, i32, i32
  }
  func.func @transform_1(%arg0: i32, %arg1: i32, %arg2: i32, %arg3: memref<2x1xi32, #tpu.memory_space<smem>>, %arg4: memref<2x1xi32, #tpu.memory_space<smem>>) -> (i32, i32, i32) {
    %c0_i32 = arith.constant 0 : i32
    %c0_i32_0 = arith.constant 0 : i32
    return %arg0, %c0_i32, %arg1 : i32, i32, i32
  }
  func.func @transform_2(%arg0: i32, %arg1: i32, %arg2: i32, %arg3: memref<2x1xi32, #tpu.memory_space<smem>>, %arg4: memref<2x1xi32, #tpu.memory_space<smem>>) -> (i32, i32) {
    %0 = arith.index_cast %arg0 : i32 to index
    %1 = arith.index_cast %arg1 : i32 to index
    %2 = memref.load %arg3[%0, %1] : memref<2x1xi32, #tpu.memory_space<smem>>
    %3 = arith.index_cast %arg0 : i32 to index
    %4 = arith.index_cast %arg1 : i32 to index
    %5 = memref.load %arg4[%3, %4] : memref<2x1xi32, #tpu.memory_space<smem>>
    %6 = arith.maxsi %2, %arg2 : i32
    %7 = arith.minsi %5, %6 : i32
    %c0_i32 = arith.constant 0 : i32
    %c0_i32_0 = arith.constant 0 : i32
    return %c0_i32, %7 : i32, i32
  }
  func.func @transform_3(%arg0: i32, %arg1: i32, %arg2: i32, %arg3: memref<2x1xi32, #tpu.memory_space<smem>>, %arg4: memref<2x1xi32, #tpu.memory_space<smem>>) -> (i32, i32) {
    %c0_i32 = arith.constant 0 : i32
    %c0_i32_0 = arith.constant 0 : i32
    %c0_i32_1 = arith.constant 0 : i32
    return %c0_i32, %c0_i32_0 : i32, i32
  }
  func.func @transform_4(%arg0: i32, %arg1: i32, %arg2: i32, %arg3: memref<2x1xi32, #tpu.memory_space<smem>>, %arg4: memref<2x1xi32, #tpu.memory_space<smem>>) -> (i32, i32, i32) {
    %c0_i32 = arith.constant 0 : i32
    %c0_i32_0 = arith.constant 0 : i32
    return %arg0, %c0_i32, %arg1 : i32, i32, i32
  }
}

</mosaic_0001>

<llo_original>
// kernel: tpu_custom_call.1
$region0: #{tpu_custom_call.1}
  #allocation0 [shape = 'u32[]', space=smem, size = 0x4, offset = 0x4, fixed_abs, tag = 'smem constant byte address 0x4 - core index']
  #allocation1 [shape = 'u32[144,128]{1,0:T(1,128)}', space=vmem, size = 0x12000, scoped, tag = 'internal scratch']
  #allocation2 [shape = 'f32[4,256]{1,0:T(4,128)}', space=vmem, size = 0x1000, scoped, tag = 'scratch operand']
  #allocation3 [shape = 's32[1]{0}', space=sflag, size = 0x4, scoped, tag = 'scoped memory for tpu_custom_call.1']
  #allocation4 [shape = 'u8[1024]{0}', space=smem, size = 0x400, scoped, tag = 'prefetched SMEM operand 0']
  #allocation5 [shape = 'u8[1024]{0}', space=smem, size = 0x400, scoped, tag = 'prefetched SMEM operand 1']
  %s0 = inlined_call_operand.vmem [shape: s32[2,1], index: 0, kind: input, shape index: {}]
  %s1 = inlined_call_operand.vmem [shape: s32[2,1], index: 1, kind: input, shape index: {}]
  %s2 = inlined_call_operand.hbm [shape: s32[2,8,256], index: 2, kind: input, shape index: {}]
  %s3 = inlined_call_operand.hbm [shape: f32[2,8,256], index: 3, kind: input, shape index: {}]
  %s4 = inlined_call_operand.vmem [shape: f32[4,128], index: 4, kind: input, shape index: {}]
  %s5 = inlined_call_operand.vmem [shape: f32[4,1], index: 5, kind: input, shape index: {}]
  %s6 = inlined_call_operand.hbm [shape: f32[2,4,256], index: 6, kind: output, shape index: {}]
  %s7 = sld [smem:[#allocation0]]
  $region69: #{tpu_custom_call.1} parent=0
    _
  %s9 = ssub.s32 1, %s7
  %s10 = scalar_select 0, %s9, %s7
  %s11 = sshll.u32 %s0, 4
  %s12 = int_to_ptr.vmem [resolvable:$true] %s11
  %14 = dma.vmem_to_smem %s12, 32, [#allocation4], [#allocation3]
  %s15 = sshll.u32 %s1, 4
  %s16 = int_to_ptr.vmem [resolvable:$true] %s15
  %18 = dma.vmem_to_smem %s16, 32, [#allocation5], [#allocation3]
  %19 = dma.done [#allocation3], 64
  %20 = sfence
  $region1: #{tpu_custom_call.1} parent=0
    #allocation6 [shape = 'u8[16384]{0}', space=vmem, size = 0x4000, scoped, tag = 'input window, operand 2']
    #allocation7 [shape = 's32[2]{0}', space=sflag, size = 0x8, scoped, tag = 'scoped memory for tpu_custom_call.1']
    #allocation8 [shape = 's32[2]{0}', space=sflag, size = 0x8, scoped, tag = 'scoped memory for tpu_custom_call.1']
    #allocation9 [shape = 'u8[16384]{0}', space=vmem, size = 0x4000, scoped, tag = 'input window, operand 3']
    #allocation10 [shape = 's32[2]{0}', space=sflag, size = 0x8, scoped, tag = 'scoped memory for tpu_custom_call.1']
    #allocation11 [shape = 'u8[8192]{0}', space=vmem, size = 0x2000, scoped, tag = 'output window, operand 0']
    %21 = vsyncpa [#allocation7], 0
    %s22 = scalar_lea.sflag [#allocation7], 1
    %23 = vsyncpa %s22, 0
    %24 = vsyncpa [#allocation10], 0
    %s25 = scalar_lea.sflag [#allocation10], 1
    %26 = vsyncpa %s25, 0
    %27 = vsyncpa [#allocation8], 0
    %s28 = scalar_lea.sflag [#allocation8], 1
    %29 = vsyncpa %s28, 0
    loop: start=0, step=1, limit=4
    $region2: #{tpu_custom_call.1} parent=1 // loop_pre_header
      _
    $region3: #{tpu_custom_call.1} parent=1 // loop_header
      %s31 = sphi 0, %s35
      %p32 = scmp.ge.s32.totalorder %s31, 4
      %s38 = sphi 0, %s57
      %s39 = sphi 0, %s53
      %s40 = sphi 0, %s49
      %s41 = sphi 0, %s38
      %s42 = sphi 0, %s39
      %s43 = sphi 0, %s40
      %s44 = sphi 0, %s41
      %s45 = sphi 0, %s42
      %s46 = sphi 0, %s43
      %s62 = sphi 0, %s64
      %s65 = sphi 0, %s62
      %s66 = sphi 0, %s65
      %s82 = sphi 0, %s66
      %s90 = sphi 0, %s92
      %s93 = sphi 0, %s90
      %s94 = sphi 0, %s93
      %s110 = sphi 0, %s94
      %s142 = sphi 0, %s144
      %s145 = sphi 0, %s142
      %s146 = sphi 0, %s145
      %s162 = sphi 0, %s146
      %s166 = sphi 0, %s166
      %s168 = sphi 0, %s166
      %s169 = sphi 0, %s168
      %s183 = sphi 0, %s169
      %s191 = sphi 0, %s193
      %s194 = sphi 0, %s191
      %s195 = sphi 0, %s194
      %s211 = sphi 0, %s195
    $region4: #{tpu_custom_call.1} parent=1 // loop_header_branch
      %34 = sbr.rel (%p32) target = $region8
    $region5: #{tpu_custom_call.1} parent=1 // loop_body
      %s36 = ssub.s32 %s31, 1
      %s37 = ssub.s32 %s31, 2
      %s47 = sadd.s32 1, %s40
      %p48 = scmp.ge.s32.totalorder %s47, 1
      %s49 = scalar_select %p48, 0, %s47
      %s50 = sadd.s32 1, %s39
      %s51 = scalar_select %p48, %s50, %s39
      %p52 = scmp.ge.s32.totalorder %s51, 1
      %s53 = scalar_select %p52, 0, %s51
      %s54 = sadd.s32 1, %s38
      %s55 = scalar_select %p52, %s54, %s38
      %p56 = scmp.ge.s32.totalorder %s55, 2
      %s57 = scalar_select %p56, 0, %s55
      %s58 = ssub.s32 %s38, %s57
      %s59 = ssub.s32 %s39, %s53
      %s60 = sor.u32 %s58, %s59
      %p61 = scmp.eq.s32.totalorder %s60, 0
      %s63 = sadd.s32 %s62, 1
      %s64 = scalar_select %p61, %s62, %s63
      %p67 = pneg %p61
      %p68 = scmp.eq.s32.totalorder %s31, 1
      %p69 = por %p67, %p68
      %p70 = scmp.ne.s32.totalorder %s62, %s65
      %p71 = scmp.eq.s32.totalorder %s31, 0
      %p72 = por %p70, %p71
      %p73 = scmp.ne.s32.totalorder %s62, %s65
      %p74 = scmp.eq.s32.totalorder %s36, 1
      %p75 = por %p73, %p74
      %p76 = scmp.ne.s32.totalorder %s65, %s66
      %p77 = scmp.eq.s32.totalorder %s36, 0
      %p78 = por %p76, %p77
      %p79 = scmp.ne.s32.totalorder %s65, %s66
      %p80 = scmp.eq.s32.totalorder %s37, 1
      %p81 = por %p79, %p80
      %p83 = scmp.ne.s32.totalorder %s66, %s82
      %p84 = scmp.eq.s32.totalorder %s37, 0
      %p85 = por %p83, %p84
      %s86 = ssub.s32 %s38, %s57
      %s87 = ssub.s32 %s39, %s53
      %s88 = sor.u32 %s86, %s87
      %p89 = scmp.eq.s32.totalorder %s88, 0
      %s91 = sadd.s32 %s90, 1
      %s92 = scalar_select %p89, %s90, %s91
      %p95 = pneg %p89
      %p96 = scmp.eq.s32.totalorder %s31, 1
      %p97 = por %p95, %p96
      %p98 = scmp.ne.s32.totalorder %s90, %s93
      %p99 = scmp.eq.s32.totalorder %s31, 0
      %p100 = por %p98, %p99
      %p101 = scmp.ne.s32.totalorder %s90, %s93
      %p102 = scmp.eq.s32.totalorder %s36, 1
      %p103 = por %p101, %p102
      %p104 = scmp.ne.s32.totalorder %s93, %s94
      %p105 = scmp.eq.s32.totalorder %s36, 0
      %p106 = por %p104, %p105
      %p107 = scmp.ne.s32.totalorder %s93, %s94
      %p108 = scmp.eq.s32.totalorder %s37, 1
      %p109 = por %p107, %p108
      %p111 = scmp.ne.s32.totalorder %s94, %s110
      %p112 = scmp.eq.s32.totalorder %s37, 0
      %p113 = por %p111, %p112
      %s114 = sshra.s32 %s39, 7
      %s115 = sand.u32 %s39, 127
      %s116 = sadd.s32 %s114, %s38
      %s117 = smul.u32 %s116, 128
      %s118 = sshra.s32 %s39, 7
      %s119 = sand.u32 %s39, 127
      %s120 = sadd.s32 %s117, %s119
      %s121 = sld [smem:[#allocation4 + %s120]]
      %s122 = sld [smem:[#allocation5 + %s120]]
      %p123 = scmp.gt.s32.totalorder %s121, %s40
      %s124 = scalar_select %p123, %s121, %s40
      %p125 = scmp.lt.s32.totalorder %s122, %s124
      %s126 = scalar_select %p125, %s122, %s124
      %s127 = sshra.s32 %s53, 7
      %s128 = sand.u32 %s53, 127
      %s129 = sadd.s32 %s127, %s57
      %s130 = smul.u32 %s129, 128
      %s131 = sshra.s32 %s53, 7
      %s132 = sand.u32 %s53, 127
      %s133 = sadd.s32 %s130, %s132
      %s134 = sld [smem:[#allocation4 + %s133]]
      %s135 = sld [smem:[#allocation5 + %s133]]
      %p136 = scmp.gt.s32.totalorder %s134, %s49
      %s137 = scalar_select %p136, %s134, %s49
      %p138 = scmp.lt.s32.totalorder %s135, %s137
      %s139 = scalar_select %p138, %s135, %s137
      %s140 = ssub.s32 %s126, %s139
      %p141 = scmp.eq.s32.totalorder %s140, 0
      %s143 = sadd.s32 %s142, 1
      %s144 = scalar_select %p141, %s142, %s143
      %p147 = pneg %p141
      %p148 = scmp.eq.s32.totalorder %s31, 1
      %p149 = por %p147, %p148
      %p150 = scmp.ne.s32.totalorder %s142, %s145
      %p151 = scmp.eq.s32.totalorder %s31, 0
      %p152 = por %p150, %p151
      %p153 = scmp.ne.s32.totalorder %s142, %s145
      %p154 = scmp.eq.s32.totalorder %s36, 1
      %p155 = por %p153, %p154
      %p156 = scmp.ne.s32.totalorder %s145, %s146
      %p157 = scmp.eq.s32.totalorder %s36, 0
      %p158 = por %p156, %p157
      %p159 = scmp.ne.s32.totalorder %s145, %s146
      %p160 = scmp.eq.s32.totalorder %s37, 1
      %p161 = por %p159, %p160
      %p163 = scmp.ne.s32.totalorder %s146, %s162
      %p164 = scmp.eq.s32.totalorder %s37, 0
      %p165 = por %p163, %p164
      %s167 = sadd.s32 %s166, 1
      %p170 = scmp.eq.s32.totalorder %s31, 1
      %p171 = scmp.ne.s32.totalorder %s166, %s168
      %p172 = scmp.eq.s32.totalorder %s31, 0
      %p173 = por %p171, %p172
      %p174 = scmp.ne.s32.totalorder %s166, %s168
      %p175 = scmp.eq.s32.totalorder %s36, 1
      %p176 = por %p174, %p175
      %p177 = scmp.ne.s32.totalorder %s168, %s169
      %p178 = scmp.eq.s32.totalorder %s36, 0
      %p179 = por %p177, %p178
      %p180 = scmp.ne.s32.totalorder %s168, %s169
      %p181 = scmp.eq.s32.totalorder %s37, 1
      %p182 = por %p180, %p181
      %p184 = scmp.ne.s32.totalorder %s169, %s183
      %p185 = scmp.eq.s32.totalorder %s37, 0
      %p186 = por %p184, %p185
      %s187 = ssub.s32 %s38, %s57
      %s188 = ssub.s32 %s39, %s53
      %s189 = sor.u32 %s187, %s188
      %p190 = scmp.eq.s32.totalorder %s189, 0
      %s192 = sadd.s32 %s191, 1
      %s193 = scalar_select %p190, %s191, %s192
      %p196 = pneg %p190
      %p197 = scmp.eq.s32.totalorder %s31, 1
      %p198 = por %p196, %p197
      %p199 = scmp.ne.s32.totalorder %s191, %s194
      %p200 = scmp.eq.s32.totalorder %s31, 0
      %p201 = por %p199, %p200
      %p202 = scmp.ne.s32.totalorder %s191, %s194
      %p203 = scmp.eq.s32.totalorder %s36, 1
      %p204 = por %p202, %p203
      %p205 = scmp.ne.s32.totalorder %s194, %s195
      %p206 = scmp.eq.s32.totalorder %s36, 0
      %p207 = por %p205, %p206
      %p208 = scmp.ne.s32.totalorder %s194, %s195
      %p209 = scmp.eq.s32.totalorder %s37, 1
      %p210 = por %p208, %p209
      %p212 = scmp.ne.s32.totalorder %s195, %s211
      %p213 = scmp.eq.s32.totalorder %s37, 0
      %p214 = por %p212, %p213
      %p215 = scmp.le.s32.totalorder 1, %s31
      %p216 = scmp.lt.s32.totalorder %s31, 3
      %p217 = pnand %p215, %p216
      %p218 = pneg %p217
      // Predicated region
      $region9: #{tpu_custom_call.1} parent=5 // pred_check
        _
      $region10: #{tpu_custom_call.1} parent=5 // pred_check_branch
        %220 = sbr.rel (%p217) target = $region12
      $region11: #{tpu_custom_call.1} parent=5 // pred_region
        %s221 = ssub.s32 %s31, 1
        // Predicated region
        $region13: #{tpu_custom_call.1} parent=11 // pred_check
          %p222 = pneg %p179
        $region14: #{tpu_custom_call.1} parent=11 // pred_check_branch
          %224 = sbr.rel (%p222) target = $region16
        $region15: #{tpu_custom_call.1} parent=11 // pred_region
          _
        $region16: #{tpu_custom_call.1} parent=11 // pred_fallthru
          _
      $region12: #{tpu_custom_call.1} parent=5 // pred_fallthru
        _
      %p225 = scmp.lt.s32.totalorder %s31, 2
      // Predicated region
      $region17: #{tpu_custom_call.1} parent=5 // pred_check
        %p226 = pneg %p225
      $region18: #{tpu_custom_call.1} parent=5 // pred_check_branch
        %228 = sbr.rel (%p226) target = $region20
      $region19: #{tpu_custom_call.1} parent=5 // pred_region
        // Predicated region
        $region21: #{tpu_custom_call.1} parent=19 // pred_check
          %p229 = pneg %p72
        $region22: #{tpu_custom_call.1} parent=19 // pred_check_branch
          %231 = sbr.rel (%p229) target = $region24
        $region23: #{tpu_custom_call.1} parent=19 // pred_region
          %s232 = sand.u32 %s62, 1
          %s233 = scalar_lea.sflag [#allocation7], %s232
          %s234 = sand.u32 %s62, 1
          %s235 = smul.addr %s234, 16
          %s236 = scalar_lea.vmem [#allocation6], %s235
          %s237 = smul.u32 2, %s39
          %s239 = ssub.s32 256, 256
          %240 = vsyncadd %s233, %s239
          %s241 = smul.addr %s38, 2
          %s242 = sadd.s32 %s237, %s241
          %s243 = smul.addr %s242, 128
          %s244 = scalar_lea.hbm %s2, %s243
          %s246 = sshll.u32 %s236, 4
          %s247 = int_to_ptr.vmem [resolvable:$true] %s246
          %249 = dma.hbm_to_vmem [thread:$0]  %s244, 256, %s247, %s233
        $region24: #{tpu_custom_call.1} parent=19 // pred_fallthru
          _
        // Predicated region
        $region25: #{tpu_custom_call.1} parent=19 // pred_check
          %p250 = pneg %p100
        $region26: #{tpu_custom_call.1} parent=19 // pred_check_branch
          %252 = sbr.rel (%p250) target = $region28
        $region27: #{tpu_custom_call.1} parent=19 // pred_region
          %s253 = sand.u32 %s90, 1
          %s254 = scalar_lea.sflag [#allocation10], %s253
          %s255 = sand.u32 %s90, 1
          %s256 = smul.addr %s255, 16
          %s257 = scalar_lea.vmem [#allocation9], %s256
          %s258 = smul.u32 2, %s39
          %s260 = ssub.s32 256, 256
          %261 = vsyncadd %s254, %s260
          %s262 = smul.addr %s38, 2
          %s263 = sadd.s32 %s258, %s262
          %s264 = smul.addr %s263, 128
          %s265 = scalar_lea.hbm %s3, %s264
          %s267 = sshll.u32 %s257, 4
          %s268 = int_to_ptr.vmem [resolvable:$true] %s267
          %270 = dma.hbm_to_vmem [thread:$0]  %s265, 256, %s268, %s254
        $region28: #{tpu_custom_call.1} parent=19 // pred_fallthru
          _
        // Predicated region
        $region29: #{tpu_custom_call.1} parent=19 // pred_check
          %p271 = pneg %p152
        $region30: #{tpu_custom_call.1} parent=19 // pred_check_branch
          %273 = sbr.rel (%p271) target = $region32
        $region31: #{tpu_custom_call.1} parent=19 // pred_region
          %s274 = sshra.s32 %s39, 7
          %s275 = sand.u32 %s39, 127
          %s276 = sadd.s32 %s274, %s38
          %s277 = smul.u32 %s276, 128
          %s278 = sshra.s32 %s39, 7
          %s279 = sand.u32 %s39, 127
          %s280 = sadd.s32 %s277, %s279
          %s281 = sld [smem:[#allocation4 + %s280]]
          %s282 = sld [smem:[#allocation5 + %s280]]
          %p283 = scmp.gt.s32.totalorder %s281, %s40
          %s284 = scalar_select %p283, %s281, %s40
          %p285 = scmp.lt.s32.totalorder %s282, %s284
          %s286 = scalar_select %p285, %s282, %s284
          %p287 = scmp.lt.s32.totalorder %s286, 0
          %s288 = scalar_select %p287, %s286, 0
          %s289 = smul.addr %s288, 4
          %s290 = scalar_lea.vmem %s4, %s289
          %s291 = sshra.s32 %s39, 7
          %s292 = sand.u32 %s39, 127
          %s293 = sadd.s32 %s291, %s38
          %s294 = smul.u32 %s293, 128
          %s295 = sshra.s32 %s39, 7
          %s296 = sand.u32 %s39, 127
          %s297 = sadd.s32 %s294, %s296
          %s298 = sld [smem:[#allocation4 + %s297]]
          %s299 = sld [smem:[#allocation5 + %s297]]
          %p300 = scmp.gt.s32.totalorder %s298, %s40
          %s301 = scalar_select %p300, %s298, %s40
          %p302 = scmp.lt.s32.totalorder %s299, %s301
          %s303 = scalar_select %p302, %s299, %s301
        $region32: #{tpu_custom_call.1} parent=19 // pred_fallthru
          _
      $region20: #{tpu_custom_call.1} parent=5 // pred_fallthru
        _
      %p304 = scmp.le.s32.totalorder 1, %s31
      %p305 = scmp.lt.s32.totalorder %s31, 3
      %p306 = pnand %p304, %p305
      %p307 = pneg %p306
      // Predicated region
      $region33: #{tpu_custom_call.1} parent=5 // pred_check
        _
      $region34: #{tpu_custom_call.1} parent=5 // pred_check_branch
        %309 = sbr.rel (%p306) target = $region36
      $region35: #{tpu_custom_call.1} parent=5 // pred_region
        %s310 = ssub.s32 %s31, 1
        %s311 = sand.u32 %s65, 1
        %s312 = scalar_lea.sflag [#allocation7], %s311
        %s313 = sand.u32 %s65, 1
        %s314 = smul.addr %s313, 16
        %s315 = scalar_lea.vmem [#allocation6], %s314
        // Predicated region
        $region37: #{tpu_custom_call.1} parent=35 // pred_check
          %p316 = pneg %p78
        $region38: #{tpu_custom_call.1} parent=35 // pred_check_branch
          %318 = sbr.rel (%p316) target = $region40
        $region39: #{tpu_custom_call.1} parent=35 // pred_region
          %319 = dma.done %s312, 256
        $region40: #{tpu_custom_call.1} parent=35 // pred_fallthru
          _
        %s320 = sand.u32 %s93, 1
        %s321 = scalar_lea.sflag [#allocation10], %s320
        %s322 = sand.u32 %s93, 1
        %s323 = smul.addr %s322, 16
        %s324 = scalar_lea.vmem [#allocation9], %s323
        // Predicated region
        $region41: #{tpu_custom_call.1} parent=35 // pred_check
          %p325 = pneg %p106
        $region42: #{tpu_custom_call.1} parent=35 // pred_check_branch
          %327 = sbr.rel (%p325) target = $region44
        $region43: #{tpu_custom_call.1} parent=35 // pred_region
          %328 = dma.done %s321, 256
        $region44: #{tpu_custom_call.1} parent=35 // pred_fallthru
          _
        %s329 = sand.u32 %s65, 1
        %s330 = scalar_lea.sflag [#allocation7], %s329
        %s331 = sand.u32 %s65, 1
        %s332 = smul.addr %s331, 16
        %s333 = scalar_lea.vmem [#allocation6], %s332
        %p334 = pneg %p78
        %p335 = pneg %p75
        %s336 = sand.u32 %s93, 1
        %s337 = scalar_lea.sflag [#allocation10], %s336
        %s338 = sand.u32 %s93, 1
        %s339 = smul.addr %s338, 16
        %s340 = scalar_lea.vmem [#allocation9], %s339
        %p341 = pneg %p106
        %p342 = pneg %p103
        %s343 = sshra.s32 %s42, 7
        %s344 = sand.u32 %s42, 127
        %s345 = sadd.s32 %s343, %s41
        %s346 = smul.u32 %s345, 128
        %s347 = sshra.s32 %s42, 7
        %s348 = sand.u32 %s42, 127
        %s349 = sadd.s32 %s346, %s348
        %s350 = sld [smem:[#allocation4 + %s349]]
        %s351 = sld [smem:[#allocation5 + %s349]]
        %p352 = scmp.gt.s32.totalorder %s350, %s43
        %s353 = scalar_select %p352, %s350, %s43
        %p354 = scmp.lt.s32.totalorder %s351, %s353
        %s355 = scalar_select %p354, %s351, %s353
        %p356 = scmp.lt.s32.totalorder %s355, 0
        %s357 = scalar_select %p356, %s355, 0
        %s358 = smul.addr %s357, 4
        %s359 = scalar_lea.vmem %s4, %s358
        %p360 = pneg %p158
        %p361 = pneg %p155
        %p362 = pneg %p179
        %p363 = pneg %p176
        %p364 = pneg %p207
        %p365 = pneg %p204
        %s366 = sand.u32 %s194, 1
        %s367 = scalar_lea.sflag [#allocation8], %s366
        %s368 = sand.u32 %s194, 1
        %s369 = smul.addr %s368, 8
        %s370 = scalar_lea.vmem [#allocation11], %s369
        %s371 = smul.u32 2, %s42
        %s372 = smul.u32 2, %s42
        %s373 = sshra.s32 %s42, 7
        %s374 = sand.u32 %s42, 127
        %s375 = sadd.s32 %s373, %s41
        %s376 = smul.u32 %s375, 128
        %s377 = sshra.s32 %s42, 7
        %s378 = sand.u32 %s42, 127
        %s379 = sadd.s32 %s376, %s378
        %s380 = sld [smem:[#allocation4 + %s379]]
        %s381 = sld [smem:[#allocation5 + %s379]]
        %p382 = scmp.gt.s32.totalorder %s380, %s43
        %s383 = scalar_select %p382, %s380, %s43
        %p384 = scmp.lt.s32.totalorder %s381, %s383
        %s385 = scalar_select %p384, %s381, %s383
        %p386 = scmp.lt.s32.totalorder %s385, 0
        %s387 = scalar_select %p386, %s385, 0
        %s388 = smul.addr %s387, 4
        %s389 = scalar_lea.vmem %s4, %s388
        %s390 = sshra.s32 %s42, 7
        %s391 = sand.u32 %s42, 127
        %s392 = sadd.s32 %s390, %s41
        %s393 = smul.u32 %s392, 128
        %s394 = sshra.s32 %s42, 7
        %s395 = sand.u32 %s42, 127
        %s396 = sadd.s32 %s393, %s395
        %s397 = sld [smem:[#allocation4 + %s396]]
        %s398 = sld [smem:[#allocation5 + %s396]]
        %p399 = scmp.gt.s32.totalorder %s397, %s43
        %s400 = scalar_select %p399, %s397, %s43
        %p401 = scmp.lt.s32.totalorder %s398, %s400
        %s402 = scalar_select %p401, %s398, %s400
        %s403 = smul.u32 2, %s42
        %p404 = scmp.eq.s32.totalorder %s43, 0
        // Predicated region
        $region45: #{tpu_custom_call.1} parent=35 // pred_check
          %p405 = pneg %p404
        $region46: #{tpu_custom_call.1} parent=35 // pred_check_branch
          %407 = sbr.rel (%p405) target = $region48
        $region47: #{tpu_custom_call.1} parent=35 // pred_region
          %408 = vst [vmem:[#allocation2] sm:$0xff] 0.0
        $region48: #{tpu_custom_call.1} parent=35 // pred_fallthru
          _
        %s409 = sshra.s32 %s42, 7
        %s410 = sand.u32 %s42, 127
        %s411 = sadd.s32 %s409, %s41
        %s412 = smul.u32 %s411, 128
        %s413 = sshra.s32 %s42, 7
        %s414 = sand.u32 %s42, 127
        %s415 = sadd.s32 %s412, %s414
        %s416 = sld [smem:[#allocation4 + %s415]]
        %p417 = scmp.ge.s32.totalorder %s43, %s416
        %s418 = sld [smem:[#allocation5 + %s415]]
        %p419 = scmp.le.s32.totalorder %s43, %s418
        %p420 = pnand %p417, %p419
        %p421 = pneg %p420
        // Predicated region
        $region49: #{tpu_custom_call.1} parent=35 // pred_check
          _
        $region50: #{tpu_custom_call.1} parent=35 // pred_check_branch
          %423 = sbr.rel (%p420) target = $region52
        $region51: #{tpu_custom_call.1} parent=35 // pred_region
          %v424 = vld [vmem:[%s315] sm:$0xff]
          %v425 = vld [vmem:[%s315 + $0x8] sm:$0xff]
          %s426 = smul.u32 %s43, 128
          %v427 = vstv %s426
          %v428 = vsub.s32 %v424, %v427
          %v429 = vsub.s32 %v425, %v427
          %v430 = vld [vmem:[%s324] sm:$0xff]
          %v431 = vld [vmem:[%s324 + $0x8] sm:$0xff]
          %v432 = vlaneseq
          %v433 = vshrl.u32 %v432, 7
          %v434 = vadd.s32 %v433, 8
          %v435 = vadd.s32 %v433, 16
          %v436 = vadd.s32 %v433, 24
          %v437 = vadd.s32 %v433, 32
          %v438 = vadd.s32 %v433, 40
          %v439 = vadd.s32 %v433, 48
          %v440 = vadd.s32 %v433, 56
          %v441 = vadd.s32 %v433, 64
          %v442 = vadd.s32 %v433, 72
          %v443 = vadd.s32 %v433, 80
          %v444 = vadd.s32 %v433, 88
          %v445 = vadd.s32 %v433, 96
          %v446 = vadd.s32 %v433, 104
          %v447 = vadd.s32 %v433, 112
          %v448 = vadd.s32 %v433, 120
          %v449 = vlaneseq
          %v450 = vshrl.u32 %v449, 7
          %v451 = vsub.s32 0, %v450
          %v452 = vrot.slane %v428, %v451
          %v453 = vlaneseq
          %v454 = vshrl.u32 %v453, 7
          %v455 = vsub.s32 0, %v454
          %v456 = vrot.slane %v429, %v455
          %vm457 = vcmp.eq.s32.totalorder %v433, %v452
          %vm458 = vcmp.eq.s32.totalorder %v433, %v456
          %vm459 = vcmp.eq.s32.totalorder %v434, %v452
          %vm460 = vcmp.eq.s32.totalorder %v434, %v456
          %vm461 = vcmp.eq.s32.totalorder %v435, %v452
          %vm462 = vcmp.eq.s32.totalorder %v435, %v456
          %vm463 = vcmp.eq.s32.totalorder %v436, %v452
          %vm464 = vcmp.eq.s32.totalorder %v436, %v456
          %vm465 = vcmp.eq.s32.totalorder %v437, %v452
          %vm466 = vcmp.eq.s32.totalorder %v437, %v456
          %vm467 = vcmp.eq.s32.totalorder %v438, %v452
          %vm468 = vcmp.eq.s32.totalorder %v438, %v456
          %vm469 = vcmp.eq.s32.totalorder %v439, %v452
          %vm470 = vcmp.eq.s32.totalorder %v439, %v456
          %vm471 = vcmp.eq.s32.totalorder %v440, %v452
          %vm472 = vcmp.eq.s32.totalorder %v440, %v456
          %vm473 = vcmp.eq.s32.totalorder %v441, %v452
          %vm474 = vcmp.eq.s32.totalorder %v441, %v456
          %vm475 = vcmp.eq.s32.totalorder %v442, %v452
          %vm476 = vcmp.eq.s32.totalorder %v442, %v456
          %vm477 = vcmp.eq.s32.totalorder %v443, %v452
          %vm478 = vcmp.eq.s32.totalorder %v443, %v456
          %vm479 = vcmp.eq.s32.totalorder %v444, %v452
          %vm480 = vcmp.eq.s32.totalorder %v444, %v456
          %vm481 = vcmp.eq.s32.totalorder %v445, %v452
          %vm482 = vcmp.eq.s32.totalorder %v445, %v456
          %vm483 = vcmp.eq.s32.totalorder %v446, %v452
          %vm484 = vcmp.eq.s32.totalorder %v446, %v456
          %vm485 = vcmp.eq.s32.totalorder %v447, %v452
          %vm486 = vcmp.eq.s32.totalorder %v447, %v456
          %vm487 = vcmp.eq.s32.totalorder %v448, %v452
          %vm488 = vcmp.eq.s32.totalorder %v448, %v456
          %v489 = vlaneseq
          %v490 = vshrl.u32 %v489, 7
          %v491 = vsub.s32 0, %v490
          %v492 = vrot.slane %v430, %v491
          %v493 = vlaneseq
          %v494 = vshrl.u32 %v493, 7
          %v495 = vsub.s32 0, %v494
          %v496 = vrot.slane %v431, %v495
          %v497 = vsel %vm457, %v492, 0.0
          %v498 = vsel %vm458, %v496, 0.0
          %v499 = vsel %vm459, %v492, 0.0
          %v500 = vsel %vm460, %v496, 0.0
          %v501 = vsel %vm461, %v492, 0.0
          %v502 = vsel %vm462, %v496, 0.0
          %v503 = vsel %vm463, %v492, 0.0
          %v504 = vsel %vm464, %v496, 0.0
          %v505 = vsel %vm465, %v492, 0.0
          %v506 = vsel %vm466, %v496, 0.0
          %v507 = vsel %vm467, %v492, 0.0
          %v508 = vsel %vm468, %v496, 0.0
          %v509 = vsel %vm469, %v492, 0.0
          %v510 = vsel %vm470, %v496, 0.0
          %v511 = vsel %vm471, %v492, 0.0
          %v512 = vsel %vm472, %v496, 0.0
          %v513 = vsel %vm473, %v492, 0.0
          %v514 = vsel %vm474, %v496, 0.0
          %v515 = vsel %vm475, %v492, 0.0
          %v516 = vsel %vm476, %v496, 0.0
          %v517 = vsel %vm477, %v492, 0.0
          %v518 = vsel %vm478, %v496, 0.0
          %v519 = vsel %vm479, %v492, 0.0
          %v520 = vsel %vm480, %v496, 0.0
          %v521 = vsel %vm481, %v492, 0.0
          %v522 = vsel %vm482, %v496, 0.0
          %v523 = vsel %vm483, %v492, 0.0
          %v524 = vsel %vm484, %v496, 0.0
          %v525 = vsel %vm485, %v492, 0.0
          %v526 = vsel %vm486, %v496, 0.0
          %v527 = vsel %vm487, %v492, 0.0
          %v528 = vsel %vm488, %v496, 0.0
          %v529 = vlaneseq
          %v530 = vshrl.u32 %v529, 7
          %v531 = vsub.s32 1, %v530
          %v532 = vrot.slane %v428, %v531
          %v533 = vlaneseq
          %v534 = vshrl.u32 %v533, 7
          %v535 = vsub.s32 1, %v534
          %v536 = vrot.slane %v429, %v535
          %vm537 = vcmp.eq.s32.totalorder %v433, %v532
          %vm538 = vcmp.eq.s32.totalorder %v433, %v536
          %vm539 = vcmp.eq.s32.totalorder %v434, %v532
          %vm540 = vcmp.eq.s32.totalorder %v434, %v536
          %vm541 = vcmp.eq.s32.totalorder %v435, %v532
          %vm542 = vcmp.eq.s32.totalorder %v435, %v536
          %vm543 = vcmp.eq.s32.totalorder %v436, %v532
          %vm544 = vcmp.eq.s32.totalorder %v436, %v536
          %vm545 = vcmp.eq.s32.totalorder %v437, %v532
          %vm546 = vcmp.eq.s32.totalorder %v437, %v536
          %vm547 = vcmp.eq.s32.totalorder %v438, %v532
          %vm548 = vcmp.eq.s32.totalorder %v438, %v536
          %vm549 = vcmp.eq.s32.totalorder %v439, %v532
          %vm550 = vcmp.eq.s32.totalorder %v439, %v536
          %vm551 = vcmp.eq.s32.totalorder %v440, %v532
          %vm552 = vcmp.eq.s32.totalorder %v440, %v536
          %vm553 = vcmp.eq.s32.totalorder %v441, %v532
          %vm554 = vcmp.eq.s32.totalorder %v441, %v536
          %vm555 = vcmp.eq.s32.totalorder %v442, %v532
          %vm556 = vcmp.eq.s32.totalorder %v442, %v536
          %vm557 = vcmp.eq.s32.totalorder %v443, %v532
          %vm558 = vcmp.eq.s32.totalorder %v443, %v536
          %vm559 = vcmp.eq.s32.totalorder %v444, %v532
          %vm560 = vcmp.eq.s32.totalorder %v444, %v536
          %vm561 = vcmp.eq.s32.totalorder %v445, %v532
          %vm562 = vcmp.eq.s32.totalorder %v445, %v536
          %vm563 = vcmp.eq.s32.totalorder %v446, %v532
          %vm564 = vcmp.eq.s32.totalorder %v446, %v536
          %vm565 = vcmp.eq.s32.totalorder %v447, %v532
          %vm566 = vcmp.eq.s32.totalorder %v447, %v536
          %vm567 = vcmp.eq.s32.totalorder %v448, %v532
          %vm568 = vcmp.eq.s32.totalorder %v448, %v536
          %v569 = vlaneseq
          %v570 = vshrl.u32 %v569, 7
          %v571 = vsub.s32 1, %v570
          %v572 = vrot.slane %v430, %v571
          %v573 = vlaneseq
          %v574 = vshrl.u32 %v573, 7
          %v575 = vsub.s32 1, %v574
          %v576 = vrot.slane %v431, %v575
          %v577 = vsel %vm537, %v572, 0.0
          %v578 = vsel %vm538, %v576, 0.0
          %v579 = vsel %vm539, %v572, 0.0
          %v580 = vsel %vm540, %v576, 0.0
          %v581 = vsel %vm541, %v572, 0.0
          %v582 = vsel %vm542, %v576, 0.0
          %v583 = vsel %vm543, %v572, 0.0
          %v584 = vsel %vm544, %v576, 0.0
          %v585 = vsel %vm545, %v572, 0.0
          %v586 = vsel %vm546, %v576, 0.0
          %v587 = vsel %vm547, %v572, 0.0
          %v588 = vsel %vm548, %v576, 0.0
          %v589 = vsel %vm549, %v572, 0.0
          %v590 = vsel %vm550, %v576, 0.0
          %v591 = vsel %vm551, %v572, 0.0
          %v592 = vsel %vm552, %v576, 0.0
          %v593 = vsel %vm553, %v572, 0.0
          %v594 = vsel %vm554, %v576, 0.0
          %v595 = vsel %vm555, %v572, 0.0
          %v596 = vsel %vm556, %v576, 0.0
          %v597 = vsel %vm557, %v572, 0.0
          %v598 = vsel %vm558, %v576, 0.0
          %v599 = vsel %vm559, %v572, 0.0
          %v600 = vsel %vm560, %v576, 0.0
          %v601 = vsel %vm561, %v572, 0.0
          %v602 = vsel %vm562, %v576, 0.0
          %v603 = vsel %vm563, %v572, 0.0
          %v604 = vsel %vm564, %v576, 0.0
          %v605 = vsel %vm565, %v572, 0.0
          %v606 = vsel %vm566, %v576, 0.0
          %v607 = vsel %vm567, %v572, 0.0
          %v608 = vsel %vm568, %v576, 0.0
          %v609 = vadd.f32 %v497, %v577
          %v610 = vadd.f32 %v498, %v578
          %v611 = vadd.f32 %v499, %v579
          %v612 = vadd.f32 %v500, %v580
          %v613 = vadd.f32 %v501, %v581
          %v614 = vadd.f32 %v502, %v582
          %v615 = vadd.f32 %v503, %v583
          %v616 = vadd.f32 %v504, %v584
          %v617 = vadd.f32 %v505, %v585
          %v618 = vadd.f32 %v506, %v586
          %v619 = vadd.f32 %v507, %v587
          %v620 = vadd.f32 %v508, %v588
          %v621 = vadd.f32 %v509, %v589
          %v622 = vadd.f32 %v510, %v590
          %v623 = vadd.f32 %v511, %v591
          %v624 = vadd.f32 %v512, %v592
          %v625 = vadd.f32 %v513, %v593
          %v626 = vadd.f32 %v514, %v594
          %v627 = vadd.f32 %v515, %v595
          %v628 = vadd.f32 %v516, %v596
          %v629 = vadd.f32 %v517, %v597
          %v630 = vadd.f32 %v518, %v598
          %v631 = vadd.f32 %v519, %v599
          %v632 = vadd.f32 %v520, %v600
          %v633 = vadd.f32 %v521, %v601
          %v634 = vadd.f32 %v522, %v602
          %v635 = vadd.f32 %v523, %v603
          %v636 = vadd.f32 %v524, %v604
          %v637 = vadd.f32 %v525, %v605
          %v638 = vadd.f32 %v526, %v606
          %v639 = vadd.f32 %v527, %v607
          %v640 = vadd.f32 %v528, %v608
          %v641 = vlaneseq
          %v642 = vshrl.u32 %v641, 7
          %v643 = vsub.s32 2, %v642
          %v644 = vrot.slane %v428, %v643
          %v645 = vlaneseq
          %v646 = vshrl.u32 %v645, 7
          %v647 = vsub.s32 2, %v646
          %v648 = vrot.slane %v429, %v647
          %vm649 = vcmp.eq.s32.totalorder %v433, %v644
          %vm650 = vcmp.eq.s32.totalorder %v433, %v648
          %vm651 = vcmp.eq.s32.totalorder %v434, %v644
          %vm652 = vcmp.eq.s32.totalorder %v434, %v648
          %vm653 = vcmp.eq.s32.totalorder %v435, %v644
          %vm654 = vcmp.eq.s32.totalorder %v435, %v648
          %vm655 = vcmp.eq.s32.totalorder %v436, %v644
          %vm656 = vcmp.eq.s32.totalorder %v436, %v648
          %vm657 = vcmp.eq.s32.totalorder %v437, %v644
          %vm658 = vcmp.eq.s32.totalorder %v437, %v648
          %vm659 = vcmp.eq.s32.totalorder %v438, %v644
          %vm660 = vcmp.eq.s32.totalorder %v438, %v648
          %vm661 = vcmp.eq.s32.totalorder %v439, %v644
          %vm662 = vcmp.eq.s32.totalorder %v439, %v648
          %vm663 = vcmp.eq.s32.totalorder %v440, %v644
          %vm664 = vcmp.eq.s32.totalorder %v440, %v648
          %vm665 = vcmp.eq.s32.totalorder %v441, %v644
          %vm666 = vcmp.eq.s32.totalorder %v441, %v648
          %vm667 = vcmp.eq.s32.totalorder %v442, %v644
          %vm668 = vcmp.eq.s32.totalorder %v442, %v648
          %vm669 = vcmp.eq.s32.totalorder %v443, %v644
          %vm670 = vcmp.eq.s32.totalorder %v443, %v648
          %vm671 = vcmp.eq.s32.totalorder %v444, %v644
          %vm672 = vcmp.eq.s32.totalorder %v444, %v648
          %vm673 = vcmp.eq.s32.totalorder %v445, %v644
          %vm674 = vcmp.eq.s32.totalorder %v445, %v648
          %vm675 = vcmp.eq.s32.totalorder %v446, %v644
          %vm676 = vcmp.eq.s32.totalorder %v446, %v648
          %vm677 = vcmp.eq.s32.totalorder %v447, %v644
          %vm678 = vcmp.eq.s32.totalorder %v447, %v648
          %vm679 = vcmp.eq.s32.totalorder %v448, %v644
          %vm680 = vcmp.eq.s32.totalorder %v448, %v648
          %v681 = vlaneseq
          %v682 = vshrl.u32 %v681, 7
          %v683 = vsub.s32 2, %v682
          %v684 = vrot.slane %v430, %v683
          %v685 = vlaneseq
          %v686 = vshrl.u32 %v685, 7
          %v687 = vsub.s32 2, %v686
          %v688 = vrot.slane %v431, %v687
          %v689 = vsel %vm649, %v684, 0.0
          %v690 = vsel %vm650, %v688, 0.0
          %v691 = vsel %vm651, %v684, 0.0
          %v692 = vsel %vm652, %v688, 0.0
          %v693 = vsel %vm653, %v684, 0.0
          %v694 = vsel %vm654, %v688, 0.0
          %v695 = vsel %vm655, %v684, 0.0
          %v696 = vsel %vm656, %v688, 0.0
          %v697 = vsel %vm657, %v684, 0.0
          %v698 = vsel %vm658, %v688, 0.0
          %v699 = vsel %vm659, %v684, 0.0
          %v700 = vsel %vm660, %v688, 0.0
          %v701 = vsel %vm661, %v684, 0.0
          %v702 = vsel %vm662, %v688, 0.0
          %v703 = vsel %vm663, %v684, 0.0
          %v704 = vsel %vm664, %v688, 0.0
          %v705 = vsel %vm665, %v684, 0.0
          %v706 = vsel %vm666, %v688, 0.0
          %v707 = vsel %vm667, %v684, 0.0
          %v708 = vsel %vm668, %v688, 0.0
          %v709 = vsel %vm669, %v684, 0.0
          %v710 = vsel %vm670, %v688, 0.0
          %v711 = vsel %vm671, %v684, 0.0
          %v712 = vsel %vm672, %v688, 0.0
          %v713 = vsel %vm673, %v684, 0.0
          %v714 = vsel %vm674, %v688, 0.0
          %v715 = vsel %vm675, %v684, 0.0
          %v716 = vsel %vm676, %v688, 0.0
          %v717 = vsel %vm677, %v684, 0.0
          %v718 = vsel %vm678, %v688, 0.0
          %v719 = vsel %vm679, %v684, 0.0
          %v720 = vsel %vm680, %v688, 0.0
          %v721 = vadd.f32 %v609, %v689
          %v722 = vadd.f32 %v610, %v690
          %v723 = vadd.f32 %v611, %v691
          %v724 = vadd.f32 %v612, %v692
          %v725 = vadd.f32 %v613, %v693
          %v726 = vadd.f32 %v614, %v694
          %v727 = vadd.f32 %v615, %v695
          %v728 = vadd.f32 %v616, %v696
          %v729 = vadd.f32 %v617, %v697
          %v730 = vadd.f32 %v618, %v698
          %v731 = vadd.f32 %v619, %v699
          %v732 = vadd.f32 %v620, %v700
          %v733 = vadd.f32 %v621, %v701
          %v734 = vadd.f32 %v622, %v702
          %v735 = vadd.f32 %v623, %v703
          %v736 = vadd.f32 %v624, %v704
          %v737 = vadd.f32 %v625, %v705
          %v738 = vadd.f32 %v626, %v706
          %v739 = vadd.f32 %v627, %v707
          %v740 = vadd.f32 %v628, %v708
          %v741 = vadd.f32 %v629, %v709
          %v742 = vadd.f32 %v630, %v710
          %v743 = vadd.f32 %v631, %v711
          %v744 = vadd.f32 %v632, %v712
          %v745 = vadd.f32 %v633, %v713
          %v746 = vadd.f32 %v634, %v714
          %v747 = vadd.f32 %v635, %v715
          %v748 = vadd.f32 %v636, %v716
          %v749 = vadd.f32 %v637, %v717
          %v750 = vadd.f32 %v638, %v718
          %v751 = vadd.f32 %v639, %v719
          %v752 = vadd.f32 %v640, %v720
          %v753 = vlaneseq
          %v754 = vshrl.u32 %v753, 7
          %v755 = vsub.s32 3, %v754
          %v756 = vrot.slane %v428, %v755
          %v757 = vlaneseq
          %v758 = vshrl.u32 %v757, 7
          %v759 = vsub.s32 3, %v758
          %v760 = vrot.slane %v429, %v759
          %vm761 = vcmp.eq.s32.totalorder %v433, %v756
          %vm762 = vcmp.eq.s32.totalorder %v433, %v760
          %vm763 = vcmp.eq.s32.totalorder %v434, %v756
          %vm764 = vcmp.eq.s32.totalorder %v434, %v760
          %vm765 = vcmp.eq.s32.totalorder %v435, %v756
          %vm766 = vcmp.eq.s32.totalorder %v435, %v760
          %vm767 = vcmp.eq.s32.totalorder %v436, %v756
          %vm768 = vcmp.eq.s32.totalorder %v436, %v760
          %vm769 = vcmp.eq.s32.totalorder %v437, %v756
          %vm770 = vcmp.eq.s32.totalorder %v437, %v760
          %vm771 = vcmp.eq.s32.totalorder %v438, %v756
          %vm772 = vcmp.eq.s32.totalorder %v438, %v760
          %vm773 = vcmp.eq.s32.totalorder %v439, %v756
          %vm774 = vcmp.eq.s32.totalorder %v439, %v760
          %vm775 = vcmp.eq.s32.totalorder %v440, %v756
          %vm776 = vcmp.eq.s32.totalorder %v440, %v760
          %vm777 = vcmp.eq.s32.totalorder %v441, %v756
          %vm778 = vcmp.eq.s32.totalorder %v441, %v760
          %vm779 = vcmp.eq.s32.totalorder %v442, %v756
          %vm780 = vcmp.eq.s32.totalorder %v442, %v760
          %vm781 = vcmp.eq.s32.totalorder %v443, %v756
          %vm782 = vcmp.eq.s32.totalorder %v443, %v760
          %vm783 = vcmp.eq.s32.totalorder %v444, %v756
          %vm784 = vcmp.eq.s32.totalorder %v444, %v760
          %vm785 = vcmp.eq.s32.totalorder %v445, %v756
          %vm786 = vcmp.eq.s32.totalorder %v445, %v760
          %vm787 = vcmp.eq.s32.totalorder %v446, %v756
          %vm788 = vcmp.eq.s32.totalorder %v446, %v760
          %vm789 = vcmp.eq.s32.totalorder %v447, %v756
          %vm790 = vcmp.eq.s32.totalorder %v447, %v760
          %vm791 = vcmp.eq.s32.totalorder %v448, %v756
          %vm792 = vcmp.eq.s32.totalorder %v448, %v760
          %v793 = vlaneseq
          %v794 = vshrl.u32 %v793, 7
          %v795 = vsub.s32 3, %v794
          %v796 = vrot.slane %v430, %v795
          %v797 = vlaneseq
          %v798 = vshrl.u32 %v797, 7
          %v799 = vsub.s32 3, %v798
          %v800 = vrot.slane %v431, %v799
          %v801 = vsel %vm761, %v796, 0.0
          %v802 = vsel %vm762, %v800, 0.0
          %v803 = vsel %vm763, %v796, 0.0
          %v804 = vsel %vm764, %v800, 0.0
          %v805 = vsel %vm765, %v796, 0.0
          %v806 = vsel %vm766, %v800, 0.0
          %v807 = vsel %vm767, %v796, 0.0
          %v808 = vsel %vm768, %v800, 0.0
          %v809 = vsel %vm769, %v796, 0.0
          %v810 = vsel %vm770, %v800, 0.0
          %v811 = vsel %vm771, %v796, 0.0
          %v812 = vsel %vm772, %v800, 0.0
          %v813 = vsel %vm773, %v796, 0.0
          %v814 = vsel %vm774, %v800, 0.0
          %v815 = vsel %vm775, %v796, 0.0
          %v816 = vsel %vm776, %v800, 0.0
          %v817 = vsel %vm777, %v796, 0.0
          %v818 = vsel %vm778, %v800, 0.0
          %v819 = vsel %vm779, %v796, 0.0
          %v820 = vsel %vm780, %v800, 0.0
          %v821 = vsel %vm781, %v796, 0.0
          %v822 = vsel %vm782, %v800, 0.0
          %v823 = vsel %vm783, %v796, 0.0
          %v824 = vsel %vm784, %v800, 0.0
          %v825 = vsel %vm785, %v796, 0.0
          %v826 = vsel %vm786, %v800, 0.0
          %v827 = vsel %vm787, %v796, 0.0
          %v828 = vsel %vm788, %v800, 0.0
          %v829 = vsel %vm789, %v796, 0.0
          %v830 = vsel %vm790, %v800, 0.0
          %v831 = vsel %vm791, %v796, 0.0
          %v832 = vsel %vm792, %v800, 0.0
          %v833 = vadd.f32 %v721, %v801
          %v834 = vadd.f32 %v722, %v802
          %v835 = vadd.f32 %v723, %v803
          %v836 = vadd.f32 %v724, %v804
          %v837 = vadd.f32 %v725, %v805
          %v838 = vadd.f32 %v726, %v806
          %v839 = vadd.f32 %v727, %v807
          %v840 = vadd.f32 %v728, %v808
          %v841 = vadd.f32 %v729, %v809
          %v842 = vadd.f32 %v730, %v810
          %v843 = vadd.f32 %v731, %v811
          %v844 = vadd.f32 %v732, %v812
          %v845 = vadd.f32 %v733, %v813
          %v846 = vadd.f32 %v734, %v814
          %v847 = vadd.f32 %v735, %v815
          %v848 = vadd.f32 %v736, %v816
          %v849 = vadd.f32 %v737, %v817
          %v850 = vadd.f32 %v738, %v818
          %v851 = vadd.f32 %v739, %v819
          %v852 = vadd.f32 %v740, %v820
          %v853 = vadd.f32 %v741, %v821
          %v854 = vadd.f32 %v742, %v822
          %v855 = vadd.f32 %v743, %v823
          %v856 = vadd.f32 %v744, %v824
          %v857 = vadd.f32 %v745, %v825
          %v858 = vadd.f32 %v746, %v826
          %v859 = vadd.f32 %v747, %v827
          %v860 = vadd.f32 %v748, %v828
          %v861 = vadd.f32 %v749, %v829
          %v862 = vadd.f32 %v750, %v830
          %v863 = vadd.f32 %v751, %v831
          %v864 = vadd.f32 %v752, %v832
          %v865 = vlaneseq
          %v866 = vshrl.u32 %v865, 7
          %v867 = vsub.s32 4, %v866
          %v868 = vrot.slane %v428, %v867
          %v869 = vlaneseq
          %v870 = vshrl.u32 %v869, 7
          %v871 = vsub.s32 4, %v870
          %v872 = vrot.slane %v429, %v871
          %vm873 = vcmp.eq.s32.totalorder %v433, %v868
          %vm874 = vcmp.eq.s32.totalorder %v433, %v872
          %vm875 = vcmp.eq.s32.totalorder %v434, %v868
          %vm876 = vcmp.eq.s32.totalorder %v434, %v872
          %vm877 = vcmp.eq.s32.totalorder %v435, %v868
          %vm878 = vcmp.eq.s32.totalorder %v435, %v872
          %vm879 = vcmp.eq.s32.totalorder %v436, %v868
          %vm880 = vcmp.eq.s32.totalorder %v436, %v872
          %vm881 = vcmp.eq.s32.totalorder %v437, %v868
          %vm882 = vcmp.eq.s32.totalorder %v437, %v872
          %vm883 = vcmp.eq.s32.totalorder %v438, %v868
          %vm884 = vcmp.eq.s32.totalorder %v438, %v872
          %vm885 = vcmp.eq.s32.totalorder %v439, %v868
          %vm886 = vcmp.eq.s32.totalorder %v439, %v872
          %vm887 = vcmp.eq.s32.totalorder %v440, %v868
          %vm888 = vcmp.eq.s32.totalorder %v440, %v872
          %vm889 = vcmp.eq.s32.totalorder %v441, %v868
          %vm890 = vcmp.eq.s32.totalorder %v441, %v872
          %vm891 = vcmp.eq.s32.totalorder %v442, %v868
          %vm892 = vcmp.eq.s32.totalorder %v442, %v872
          %vm893 = vcmp.eq.s32.totalorder %v443, %v868
          %vm894 = vcmp.eq.s32.totalorder %v443, %v872
          %vm895 = vcmp.eq.s32.totalorder %v444, %v868
          %vm896 = vcmp.eq.s32.totalorder %v444, %v872
          %vm897 = vcmp.eq.s32.totalorder %v445, %v868
          %vm898 = vcmp.eq.s32.totalorder %v445, %v872
          %vm899 = vcmp.eq.s32.totalorder %v446, %v868
          %vm900 = vcmp.eq.s32.totalorder %v446, %v872
          %vm901 = vcmp.eq.s32.totalorder %v447, %v868
          %vm902 = vcmp.eq.s32.totalorder %v447, %v872
          %vm903 = vcmp.eq.s32.totalorder %v448, %v868
          %vm904 = vcmp.eq.s32.totalorder %v448, %v872
          %v905 = vlaneseq
          %v906 = vshrl.u32 %v905, 7
          %v907 = vsub.s32 4, %v906
          %v908 = vrot.slane %v430, %v907
          %v909 = vlaneseq
          %v910 = vshrl.u32 %v909, 7
          %v911 = vsub.s32 4, %v910
          %v912 = vrot.slane %v431, %v911
          %v913 = vsel %vm873, %v908, 0.0
          %v914 = vsel %vm874, %v912, 0.0
          %v915 = vsel %vm875, %v908, 0.0
          %v916 = vsel %vm876, %v912, 0.0
          %v917 = vsel %vm877, %v908, 0.0
          %v918 = vsel %vm878, %v912, 0.0
          %v919 = vsel %vm879, %v908, 0.0
          %v920 = vsel %vm880, %v912, 0.0
          %v921 = vsel %vm881, %v908, 0.0
          %v922 = vsel %vm882, %v912, 0.0
          %v923 = vsel %vm883, %v908, 0.0
          %v924 = vsel %vm884, %v912, 0.0
          %v925 = vsel %vm885, %v908, 0.0
          %v926 = vsel %vm886, %v912, 0.0
          %v927 = vsel %vm887, %v908, 0.0
          %v928 = vsel %vm888, %v912, 0.0
          %v929 = vsel %vm889, %v908, 0.0
          %v930 = vsel %vm890, %v912, 0.0
          %v931 = vsel %vm891, %v908, 0.0
          %v932 = vsel %vm892, %v912, 0.0
          %v933 = vsel %vm893, %v908, 0.0
          %v934 = vsel %vm894, %v912, 0.0
          %v935 = vsel %vm895, %v908, 0.0
          %v936 = vsel %vm896, %v912, 0.0
          %v937 = vsel %vm897, %v908, 0.0
          %v938 = vsel %vm898, %v912, 0.0
          %v939 = vsel %vm899, %v908, 0.0
          %v940 = vsel %vm900, %v912, 0.0
          %v941 = vsel %vm901, %v908, 0.0
          %v942 = vsel %vm902, %v912, 0.0
          %v943 = vsel %vm903, %v908, 0.0
          %v944 = vsel %vm904, %v912, 0.0
          %v945 = vadd.f32 %v833, %v913
          %v946 = vadd.f32 %v834, %v914
          %v947 = vadd.f32 %v835, %v915
          %v948 = vadd.f32 %v836, %v916
          %v949 = vadd.f32 %v837, %v917
          %v950 = vadd.f32 %v838, %v918
          %v951 = vadd.f32 %v839, %v919
          %v952 = vadd.f32 %v840, %v920
          %v953 = vadd.f32 %v841, %v921
          %v954 = vadd.f32 %v842, %v922
          %v955 = vadd.f32 %v843, %v923
          %v956 = vadd.f32 %v844, %v924
          %v957 = vadd.f32 %v845, %v925
          %v958 = vadd.f32 %v846, %v926
          %v959 = vadd.f32 %v847, %v927
          %v960 = vadd.f32 %v848, %v928
          %v961 = vadd.f32 %v849, %v929
          %v962 = vadd.f32 %v850, %v930
          %v963 = vadd.f32 %v851, %v931
          %v964 = vadd.f32 %v852, %v932
          %v965 = vadd.f32 %v853, %v933
          %v966 = vadd.f32 %v854, %v934
          %v967 = vadd.f32 %v855, %v935
          %v968 = vadd.f32 %v856, %v936
          %v969 = vadd.f32 %v857, %v937
          %v970 = vadd.f32 %v858, %v938
          %v971 = vadd.f32 %v859, %v939
          %v972 = vadd.f32 %v860, %v940
          %v973 = vadd.f32 %v861, %v941
          %v974 = vadd.f32 %v862, %v942
          %v975 = vadd.f32 %v863, %v943
          %v976 = vadd.f32 %v864, %v944
          %v977 = vlaneseq
          %v978 = vshrl.u32 %v977, 7
          %v979 = vsub.s32 5, %v978
          %v980 = vrot.slane %v428, %v979
          %v981 = vlaneseq
          %v982 = vshrl.u32 %v981, 7
          %v983 = vsub.s32 5, %v982
          %v984 = vrot.slane %v429, %v983
          %vm985 = vcmp.eq.s32.totalorder %v433, %v980
          %vm986 = vcmp.eq.s32.totalorder %v433, %v984
          %vm987 = vcmp.eq.s32.totalorder %v434, %v980
          %vm988 = vcmp.eq.s32.totalorder %v434, %v984
          %vm989 = vcmp.eq.s32.totalorder %v435, %v980
          %vm990 = vcmp.eq.s32.totalorder %v435, %v984
          %vm991 = vcmp.eq.s32.totalorder %v436, %v980
          %vm992 = vcmp.eq.s32.totalorder %v436, %v984
          %vm993 = vcmp.eq.s32.totalorder %v437, %v980
          %vm994 = vcmp.eq.s32.totalorder %v437, %v984
          %vm995 = vcmp.eq.s32.totalorder %v438, %v980
          %vm996 = vcmp.eq.s32.totalorder %v438, %v984
          %vm997 = vcmp.eq.s32.totalorder %v439, %v980
          %vm998 = vcmp.eq.s32.totalorder %v439, %v984
          %vm999 = vcmp.eq.s32.totalorder %v440, %v980
          %vm1000 = vcmp.eq.s32.totalorder %v440, %v984
          %vm1001 = vcmp.eq.s32.totalorder %v441, %v980
          %vm1002 = vcmp.eq.s32.totalorder %v441, %v984
          %vm1003 = vcmp.eq.s32.totalorder %v442, %v980
          %vm1004 = vcmp.eq.s32.totalorder %v442, %v984
          %vm1005 = vcmp.eq.s32.totalorder %v443, %v980
          %vm1006 = vcmp.eq.s32.totalorder %v443, %v984
          %vm1007 = vcmp.eq.s32.totalorder %v444, %v980
          %vm1008 = vcmp.eq.s32.totalorder %v444, %v984
          %vm1009 = vcmp.eq.s32.totalorder %v445, %v980
          %vm1010 = vcmp.eq.s32.totalorder %v445, %v984
          %vm1011 = vcmp.eq.s32.totalorder %v446, %v980
          %vm1012 = vcmp.eq.s32.totalorder %v446, %v984
          %vm1013 = vcmp.eq.s32.totalorder %v447, %v980
          %vm1014 = vcmp.eq.s32.totalorder %v447, %v984
          %vm1015 = vcmp.eq.s32.totalorder %v448, %v980
          %vm1016 = vcmp.eq.s32.totalorder %v448, %v984
          %v1017 = vlaneseq
          %v1018 = vshrl.u32 %v1017, 7
          %v1019 = vsub.s32 5, %v1018
          %v1020 = vrot.slane %v430, %v1019
          %v1021 = vlaneseq
          %v1022 = vshrl.u32 %v1021, 7
          %v1023 = vsub.s32 5, %v1022
          %v1024 = vrot.slane %v431, %v1023
          %v1025 = vsel %vm985, %v1020, 0.0
          %v1026 = vsel %vm986, %v1024, 0.0
          %v1027 = vsel %vm987, %v1020, 0.0
          %v1028 = vsel %vm988, %v1024, 0.0
          %v1029 = vsel %vm989, %v1020, 0.0
          %v1030 = vsel %vm990, %v1024, 0.0
          %v1031 = vsel %vm991, %v1020, 0.0
          %v1032 = vsel %vm992, %v1024, 0.0
          %v1033 = vsel %vm993, %v1020, 0.0
          %v1034 = vsel %vm994, %v1024, 0.0
          %v1035 = vsel %vm995, %v1020, 0.0
          %v1036 = vsel %vm996, %v1024, 0.0
          %v1037 = vsel %vm997, %v1020, 0.0
          %v1038 = vsel %vm998, %v1024, 0.0
          %v1039 = vsel %vm999, %v1020, 0.0
          %v1040 = vsel %vm1000, %v1024, 0.0
          %v1041 = vsel %vm1001, %v1020, 0.0
          %v1042 = vsel %vm1002, %v1024, 0.0
          %v1043 = vsel %vm1003, %v1020, 0.0
          %v1044 = vsel %vm1004, %v1024, 0.0
          %v1045 = vsel %vm1005, %v1020, 0.0
          %v1046 = vsel %vm1006, %v1024, 0.0
          %v1047 = vsel %vm1007, %v1020, 0.0
          %v1048 = vsel %vm1008, %v1024, 0.0
          %v1049 = vsel %vm1009, %v1020, 0.0
          %v1050 = vsel %vm1010, %v1024, 0.0
          %v1051 = vsel %vm1011, %v1020, 0.0
          %v1052 = vsel %vm1012, %v1024, 0.0
          %v1053 = vsel %vm1013, %v1020, 0.0
          %v1054 = vsel %vm1014, %v1024, 0.0
          %v1055 = vsel %vm1015, %v1020, 0.0
          %v1056 = vsel %vm1016, %v1024, 0.0
          %v1057 = vadd.f32 %v945, %v1025
          %v1058 = vadd.f32 %v946, %v1026
          %v1059 = vadd.f32 %v947, %v1027
          %v1060 = vadd.f32 %v948, %v1028
          %v1061 = vadd.f32 %v949, %v1029
          %v1062 = vadd.f32 %v950, %v1030
          %v1063 = vadd.f32 %v951, %v1031
          %v1064 = vadd.f32 %v952, %v1032
          %v1065 = vadd.f32 %v953, %v1033
          %v1066 = vadd.f32 %v954, %v1034
          %v1067 = vadd.f32 %v955, %v1035
          %v1068 = vadd.f32 %v956, %v1036
          %v1069 = vadd.f32 %v957, %v1037
          %v1070 = vadd.f32 %v958, %v1038
          %v1071 = vadd.f32 %v959, %v1039
          %v1072 = vadd.f32 %v960, %v1040
          %v1073 = vadd.f32 %v961, %v1041
          %v1074 = vadd.f32 %v962, %v1042
          %v1075 = vadd.f32 %v963, %v1043
          %v1076 = vadd.f32 %v964, %v1044
          %v1077 = vadd.f32 %v965, %v1045
          %v1078 = vadd.f32 %v966, %v1046
          %v1079 = vadd.f32 %v967, %v1047
          %v1080 = vadd.f32 %v968, %v1048
          %v1081 = vadd.f32 %v969, %v1049
          %v1082 = vadd.f32 %v970, %v1050
          %v1083 = vadd.f32 %v971, %v1051
          %v1084 = vadd.f32 %v972, %v1052
          %v1085 = vadd.f32 %v973, %v1053
          %v1086 = vadd.f32 %v974, %v1054
          %v1087 = vadd.f32 %v975, %v1055
          %v1088 = vadd.f32 %v976, %v1056
          %v1089 = vlaneseq
          %v1090 = vshrl.u32 %v1089, 7
          %v1091 = vsub.s32 6, %v1090
          %v1092 = vrot.slane %v428, %v1091
          %v1093 = vlaneseq
          %v1094 = vshrl.u32 %v1093, 7
          %v1095 = vsub.s32 6, %v1094
          %v1096 = vrot.slane %v429, %v1095
          %vm1097 = vcmp.eq.s32.totalorder %v433, %v1092
          %vm1098 = vcmp.eq.s32.totalorder %v433, %v1096
          %vm1099 = vcmp.eq.s32.totalorder %v434, %v1092
          %vm1100 = vcmp.eq.s32.totalorder %v434, %v1096
          %vm1101 = vcmp.eq.s32.totalorder %v435, %v1092
          %vm1102 = vcmp.eq.s32.totalorder %v435, %v1096
          %vm1103 = vcmp.eq.s32.totalorder %v436, %v1092
          %vm1104 = vcmp.eq.s32.totalorder %v436, %v1096
          %vm1105 = vcmp.eq.s32.totalorder %v437, %v1092
          %vm1106 = vcmp.eq.s32.totalorder %v437, %v1096
          %vm1107 = vcmp.eq.s32.totalorder %v438, %v1092
          %vm1108 = vcmp.eq.s32.totalorder %v438, %v1096
          %vm1109 = vcmp.eq.s32.totalorder %v439, %v1092
          %vm1110 = vcmp.eq.s32.totalorder %v439, %v1096
          %vm1111 = vcmp.eq.s32.totalorder %v440, %v1092
          %vm1112 = vcmp.eq.s32.totalorder %v440, %v1096
          %vm1113 = vcmp.eq.s32.totalorder %v441, %v1092
          %vm1114 = vcmp.eq.s32.totalorder %v441, %v1096
          %vm1115 = vcmp.eq.s32.totalorder %v442, %v1092
          %vm1116 = vcmp.eq.s32.totalorder %v442, %v1096
          %vm1117 = vcmp.eq.s32.totalorder %v443, %v1092
          %vm1118 = vcmp.eq.s32.totalorder %v443, %v1096
          %vm1119 = vcmp.eq.s32.totalorder %v444, %v1092
          %vm1120 = vcmp.eq.s32.totalorder %v444, %v1096
          %vm1121 = vcmp.eq.s32.totalorder %v445, %v1092
          %vm1122 = vcmp.eq.s32.totalorder %v445, %v1096
          %vm1123 = vcmp.eq.s32.totalorder %v446, %v1092
          %vm1124 = vcmp.eq.s32.totalorder %v446, %v1096
          %vm1125 = vcmp.eq.s32.totalorder %v447, %v1092
          %vm1126 = vcmp.eq.s32.totalorder %v447, %v1096
          %vm1127 = vcmp.eq.s32.totalorder %v448, %v1092
          %vm1128 = vcmp.eq.s32.totalorder %v448, %v1096
          %v1129 = vlaneseq
          %v1130 = vshrl.u32 %v1129, 7
          %v1131 = vsub.s32 6, %v1130
          %v1132 = vrot.slane %v430, %v1131
          %v1133 = vlaneseq
          %v1134 = vshrl.u32 %v1133, 7
          %v1135 = vsub.s32 6, %v1134
          %v1136 = vrot.slane %v431, %v1135
          %v1137 = vsel %vm1097, %v1132, 0.0
          %v1138 = vsel %vm1098, %v1136, 0.0
          %v1139 = vsel %vm1099, %v1132, 0.0
          %v1140 = vsel %vm1100, %v1136, 0.0
          %v1141 = vsel %vm1101, %v1132, 0.0
          %v1142 = vsel %vm1102, %v1136, 0.0
          %v1143 = vsel %vm1103, %v1132, 0.0
          %v1144 = vsel %vm1104, %v1136, 0.0
          %v1145 = vsel %vm1105, %v1132, 0.0
          %v1146 = vsel %vm1106, %v1136, 0.0
          %v1147 = vsel %vm1107, %v1132, 0.0
          %v1148 = vsel %vm1108, %v1136, 0.0
          %v1149 = vsel %vm1109, %v1132, 0.0
          %v1150 = vsel %vm1110, %v1136, 0.0
          %v1151 = vsel %vm1111, %v1132, 0.0
          %v1152 = vsel %vm1112, %v1136, 0.0
          %v1153 = vsel %vm1113, %v1132, 0.0
          %v1154 = vsel %vm1114, %v1136, 0.0
          %v1155 = vsel %vm1115, %v1132, 0.0
          %v1156 = vsel %vm1116, %v1136, 0.0
          %v1157 = vsel %vm1117, %v1132, 0.0
          %v1158 = vsel %vm1118, %v1136, 0.0
          %v1159 = vsel %vm1119, %v1132, 0.0
          %v1160 = vsel %vm1120, %v1136, 0.0
          %v1161 = vsel %vm1121, %v1132, 0.0
          %v1162 = vsel %vm1122, %v1136, 0.0
          %v1163 = vsel %vm1123, %v1132, 0.0
          %v1164 = vsel %vm1124, %v1136, 0.0
          %v1165 = vsel %vm1125, %v1132, 0.0
          %v1166 = vsel %vm1126, %v1136, 0.0
          %v1167 = vsel %vm1127, %v1132, 0.0
          %v1168 = vsel %vm1128, %v1136, 0.0
          %v1169 = vadd.f32 %v1057, %v1137
          %v1170 = vadd.f32 %v1058, %v1138
          %v1171 = vadd.f32 %v1059, %v1139
          %v1172 = vadd.f32 %v1060, %v1140
          %v1173 = vadd.f32 %v1061, %v1141
          %v1174 = vadd.f32 %v1062, %v1142
          %v1175 = vadd.f32 %v1063, %v1143
          %v1176 = vadd.f32 %v1064, %v1144
          %v1177 = vadd.f32 %v1065, %v1145
          %v1178 = vadd.f32 %v1066, %v1146
          %v1179 = vadd.f32 %v1067, %v1147
          %v1180 = vadd.f32 %v1068, %v1148
          %v1181 = vadd.f32 %v1069, %v1149
          %v1182 = vadd.f32 %v1070, %v1150
          %v1183 = vadd.f32 %v1071, %v1151
          %v1184 = vadd.f32 %v1072, %v1152
          %v1185 = vadd.f32 %v1073, %v1153
          %v1186 = vadd.f32 %v1074, %v1154
          %v1187 = vadd.f32 %v1075, %v1155
          %v1188 = vadd.f32 %v1076, %v1156
          %v1189 = vadd.f32 %v1077, %v1157
          %v1190 = vadd.f32 %v1078, %v1158
          %v1191 = vadd.f32 %v1079, %v1159
          %v1192 = vadd.f32 %v1080, %v1160
          %v1193 = vadd.f32 %v1081, %v1161
          %v1194 = vadd.f32 %v1082, %v1162
          %v1195 = vadd.f32 %v1083, %v1163
          %v1196 = vadd.f32 %v1084, %v1164
          %v1197 = vadd.f32 %v1085, %v1165
          %v1198 = vadd.f32 %v1086, %v1166
          %v1199 = vadd.f32 %v1087, %v1167
          %v1200 = vadd.f32 %v1088, %v1168
          %v1201 = vlaneseq
          %v1202 = vshrl.u32 %v1201, 7
          %v1203 = vsub.s32 7, %v1202
          %v1204 = vrot.slane %v428, %v1203
          %v1205 = vlaneseq
          %v1206 = vshrl.u32 %v1205, 7
          %v1207 = vsub.s32 7, %v1206
          %v1208 = vrot.slane %v429, %v1207
          %vm1209 = vcmp.eq.s32.totalorder %v433, %v1204
          %vm1210 = vcmp.eq.s32.totalorder %v433, %v1208
          %vm1211 = vcmp.eq.s32.totalorder %v434, %v1204
          %vm1212 = vcmp.eq.s32.totalorder %v434, %v1208
          %vm1213 = vcmp.eq.s32.totalorder %v435, %v1204
          %vm1214 = vcmp.eq.s32.totalorder %v435, %v1208
          %vm1215 = vcmp.eq.s32.totalorder %v436, %v1204
          %vm1216 = vcmp.eq.s32.totalorder %v436, %v1208
          %vm1217 = vcmp.eq.s32.totalorder %v437, %v1204
          %vm1218 = vcmp.eq.s32.totalorder %v437, %v1208
          %vm1219 = vcmp.eq.s32.totalorder %v438, %v1204
          %vm1220 = vcmp.eq.s32.totalorder %v438, %v1208
          %vm1221 = vcmp.eq.s32.totalorder %v439, %v1204
          %vm1222 = vcmp.eq.s32.totalorder %v439, %v1208
          %vm1223 = vcmp.eq.s32.totalorder %v440, %v1204
          %vm1224 = vcmp.eq.s32.totalorder %v440, %v1208
          %vm1225 = vcmp.eq.s32.totalorder %v441, %v1204
          %vm1226 = vcmp.eq.s32.totalorder %v441, %v1208
          %vm1227 = vcmp.eq.s32.totalorder %v442, %v1204
          %vm1228 = vcmp.eq.s32.totalorder %v442, %v1208
          %vm1229 = vcmp.eq.s32.totalorder %v443, %v1204
          %vm1230 = vcmp.eq.s32.totalorder %v443, %v1208
          %vm1231 = vcmp.eq.s32.totalorder %v444, %v1204
          %vm1232 = vcmp.eq.s32.totalorder %v444, %v1208
          %vm1233 = vcmp.eq.s32.totalorder %v445, %v1204
          %vm1234 = vcmp.eq.s32.totalorder %v445, %v1208
          %vm1235 = vcmp.eq.s32.totalorder %v446, %v1204
          %vm1236 = vcmp.eq.s32.totalorder %v446, %v1208
          %vm1237 = vcmp.eq.s32.totalorder %v447, %v1204
          %vm1238 = vcmp.eq.s32.totalorder %v447, %v1208
          %vm1239 = vcmp.eq.s32.totalorder %v448, %v1204
          %vm1240 = vcmp.eq.s32.totalorder %v448, %v1208
          %v1241 = vlaneseq
          %v1242 = vshrl.u32 %v1241, 7
          %v1243 = vsub.s32 7, %v1242
          %v1244 = vrot.slane %v430, %v1243
          %v1245 = vlaneseq
          %v1246 = vshrl.u32 %v1245, 7
          %v1247 = vsub.s32 7, %v1246
          %v1248 = vrot.slane %v431, %v1247
          %v1249 = vsel %vm1209, %v1244, 0.0
          %v1250 = vsel %vm1210, %v1248, 0.0
          %v1251 = vsel %vm1211, %v1244, 0.0
          %v1252 = vsel %vm1212, %v1248, 0.0
          %v1253 = vsel %vm1213, %v1244, 0.0
          %v1254 = vsel %vm1214, %v1248, 0.0
          %v1255 = vsel %vm1215, %v1244, 0.0
          %v1256 = vsel %vm1216, %v1248, 0.0
          %v1257 = vsel %vm1217, %v1244, 0.0
          %v1258 = vsel %vm1218, %v1248, 0.0
          %v1259 = vsel %vm1219, %v1244, 0.0
          %v1260 = vsel %vm1220, %v1248, 0.0
          %v1261 = vsel %vm1221, %v1244, 0.0
          %v1262 = vsel %vm1222, %v1248, 0.0
          %v1263 = vsel %vm1223, %v1244, 0.0
          %v1264 = vsel %vm1224, %v1248, 0.0
          %v1265 = vsel %vm1225, %v1244, 0.0
          %v1266 = vsel %vm1226, %v1248, 0.0
          %v1267 = vsel %vm1227, %v1244, 0.0
          %v1268 = vsel %vm1228, %v1248, 0.0
          %v1269 = vsel %vm1229, %v1244, 0.0
          %v1270 = vsel %vm1230, %v1248, 0.0
          %v1271 = vsel %vm1231, %v1244, 0.0
          %v1272 = vsel %vm1232, %v1248, 0.0
          %v1273 = vsel %vm1233, %v1244, 0.0
          %v1274 = vsel %vm1234, %v1248, 0.0
          %v1275 = vsel %vm1235, %v1244, 0.0
          %v1276 = vsel %vm1236, %v1248, 0.0
          %v1277 = vsel %vm1237, %v1244, 0.0
          %v1278 = vsel %vm1238, %v1248, 0.0
          %v1279 = vsel %vm1239, %v1244, 0.0
          %v1280 = vsel %vm1240, %v1248, 0.0
          %v1281 = vadd.f32 %v1169, %v1249
          %v1282 = vadd.f32 %v1170, %v1250
          %v1283 = vadd.f32 %v1171, %v1251
          %v1284 = vadd.f32 %v1172, %v1252
          %v1285 = vadd.f32 %v1173, %v1253
          %v1286 = vadd.f32 %v1174, %v1254
          %v1287 = vadd.f32 %v1175, %v1255
          %v1288 = vadd.f32 %v1176, %v1256
          %v1289 = vadd.f32 %v1177, %v1257
          %v1290 = vadd.f32 %v1178, %v1258
          %v1291 = vadd.f32 %v1179, %v1259
          %v1292 = vadd.f32 %v1180, %v1260
          %v1293 = vadd.f32 %v1181, %v1261
          %v1294 = vadd.f32 %v1182, %v1262
          %v1295 = vadd.f32 %v1183, %v1263
          %v1296 = vadd.f32 %v1184, %v1264
          %v1297 = vadd.f32 %v1185, %v1265
          %v1298 = vadd.f32 %v1186, %v1266
          %v1299 = vadd.f32 %v1187, %v1267
          %v1300 = vadd.f32 %v1188, %v1268
          %v1301 = vadd.f32 %v1189, %v1269
          %v1302 = vadd.f32 %v1190, %v1270
          %v1303 = vadd.f32 %v1191, %v1271
          %v1304 = vadd.f32 %v1192, %v1272
          %v1305 = vadd.f32 %v1193, %v1273
          %v1306 = vadd.f32 %v1194, %v1274
          %v1307 = vadd.f32 %v1195, %v1275
          %v1308 = vadd.f32 %v1196, %v1276
          %v1309 = vadd.f32 %v1197, %v1277
          %v1310 = vadd.f32 %v1198, %v1278
          %v1311 = vadd.f32 %v1199, %v1279
          %v1312 = vadd.f32 %v1200, %v1280
          %v1313 = vld [vmem:[#allocation2] sm:$0xff]
          %v1314 = vld [vmem:[%s389] sm:$0xf]
          %1315 = vmatprep.subr.mxu0 %v1312
          %1316 = vmatpush1.msra.mxu0 %v1311
          %1317 = vmatprep.subr.mxu0 %v1310
          %1318 = vmatpush1.msra.mxu0 %v1309
          %1319 = vmatprep.subr.mxu0 %v1308
          %1320 = vmatpush1.msra.mxu0 %v1307
          %1321 = vmatprep.subr.mxu0 %v1306
          %1322 = vmatpush1.msra.mxu0 %v1305
          %1323 = vmatprep.subr.mxu0 %v1304
          %1324 = vmatpush1.msra.mxu0 %v1303
          %1325 = vmatprep.subr.mxu0 %v1302
          %1326 = vmatpush1.msra.mxu0 %v1301
          %1327 = vmatprep.subr.mxu0 %v1300
          %1328 = vmatpush1.msra.mxu0 %v1299
          %1329 = vmatprep.subr.mxu0 %v1298
          %1330 = vmatpush1.msra.mxu0 %v1297
          %1331 = vmatprep.subr.mxu0 %v1296
          %1332 = vmatpush1.msra.mxu0 %v1295
          %1333 = vmatprep.subr.mxu0 %v1294
          %1334 = vmatpush1.msra.mxu0 %v1293
          %1335 = vmatprep.subr.mxu0 %v1292
          %1336 = vmatpush1.msra.mxu0 %v1291
          %1337 = vmatprep.subr.mxu0 %v1290
          %1338 = vmatpush1.msra.mxu0 %v1289
          %1339 = vmatprep.subr.mxu0 %v1288
          %1340 = vmatpush1.msra.mxu0 %v1287
          %1341 = vmatprep.subr.mxu0 %v1286
          %1342 = vmatpush1.msra.mxu0 %v1285
          %1343 = vmatprep.subr.mxu0 %v1284
          %1344 = vmatpush1.msra.mxu0 %v1283
          %1345 = vmatprep.subr.mxu0 %v1282
          %1346 = vmatpush1.msra.mxu0 %v1281
          %1347 = vmatprep.subr.mxu0 0.0
          %1348 = vmatpush2.msra.mxu0 0.0
          %1349 = vmatprep.subr.mxu0 0.0
          %1350 = vmatpush2.msra.mxu0 0.0
          %1351 = vmatprep.subr.mxu0 0.0
          %1352 = vmatpush2.msra.mxu0 0.0
          %1353 = vmatprep.subr.mxu0 0.0
          %1354 = vmatpush2.msra.mxu0 0.0
          %1355 = vmatprep.subr.mxu0 0.0
          %1356 = vmatpush2.msra.mxu0 0.0
          %1357 = vmatprep.subr.mxu0 0.0
          %1358 = vmatpush2.msra.mxu0 0.0
          %1359 = vmatprep.subr.mxu0 0.0
          %1360 = vmatpush2.msra.mxu0 0.0
          %1361 = vmatprep.subr.mxu0 0.0
          %1362 = vmatpush2.msra.mxu0 0.0
          %1363 = vmatprep.subr.mxu0 0.0
          %1364 = vmatpush2.msra.mxu0 0.0
          %1365 = vmatprep.subr.mxu0 0.0
          %1366 = vmatpush2.msra.mxu0 0.0
          %1367 = vmatprep.subr.mxu0 0.0
          %1368 = vmatpush2.msra.mxu0 0.0
          %1369 = vmatprep.subr.mxu0 0.0
          %1370 = vmatpush2.msra.mxu0 0.0
          %1371 = vmatprep.subr.mxu0 0.0
          %1372 = vmatpush2.msra.mxu0 0.0
          %1373 = vmatprep.subr.mxu0 0.0
          %1374 = vmatpush2.msra.mxu0 0.0
          %1375 = vmatprep.subr.mxu0 0.0
          %1376 = vmatpush2.msra.mxu0 0.0
          %1377 = vmatprep.subr.mxu0 0.0
          %1378 = vmatpush2.msra.mxu0 0.0
          %1379 = vmatprep.mubr.f32.mxu0 0.0
          %1380 = vmatmul.mubr.f32.gmra.mxu0 %v1314
          %v1381 = vpop.f32.mrf.mxu0
          %v1382 = vadd.f32 0.0, %v1381
          %v1383 = vpop.f32.mrf.mxu0
          %v1384 = vadd.f32 0.0, %v1383
          %1385 = vdwg.mxu0
          %v1388 = vcombine.low %v1382, %v1384
          %v1390 = vadd.f32 %v1313, %v1388
          %1391 = vst [vmem:[#allocation2] sm:$0xff] %v1390
        $region52: #{tpu_custom_call.1} parent=35 // pred_fallthru
          _
        // Predicated region
        $region53: #{tpu_custom_call.1} parent=35 // pred_check
          %p1392 = pneg %p404
        $region54: #{tpu_custom_call.1} parent=35 // pred_check_branch
          %1394 = sbr.rel (%p1392) target = $region56
        $region55: #{tpu_custom_call.1} parent=35 // pred_region
          %v1395 = vld [vmem:[%s315] sm:$0xff]
          %v1396 = vld [vmem:[%s315 + $0x8] sm:$0xff]
          %vm1397 = vcmp.ge.s32.totalorder %v1395, 0
          %vm1398 = vcmp.ge.s32.totalorder %v1396, 0
          %v1399 = vld [vmem:[%s324] sm:$0xff]
          %v1400 = vld [vmem:[%s324 + $0x8] sm:$0xff]
          %v1401 = vsel %vm1397, %v1399, 0.0
          %v1402 = vsel %vm1398, %v1400, 0.0
          %v1403 = vrot.slane %v1401, 4
          %v1404 = vadd.f32 %v1401, %v1403
          %v1405 = vrot.slane %v1404, 2
          %v1406 = vadd.f32 %v1404, %v1405
          %v1407 = vrot.slane %v1406, 1
          %v1408 = vadd.f32 %v1406, %v1407
          %v1409 = vrot.slane %v1402, 4
          %v1410 = vadd.f32 %v1402, %v1409
          %v1411 = vrot.slane %v1410, 2
          %v1412 = vadd.f32 %v1410, %v1411
          %v1413 = vrot.slane %v1412, 1
          %v1414 = vadd.f32 %v1412, %v1413
          %v1415 = vmax.f32 %v1408, 0.0001
          %v1416 = vmax.f32 %v1414, 0.0001
          %v1417 = vrcp.pop %v1415
          %v1418 = vrcp.pop %v1416
          %v1419 = vld [vmem:[#allocation2] sm:$0xff]
          %v1422 = vcombine.low %v1417, %v1418
          %v1424 = vmul.f32 %v1419, %v1422
          %vm1425 = vcmp.lt.s32.totalorder %v1395, 0
          %vm1426 = vcmp.lt.s32.totalorder %v1396, 0
          %v1427 = vld [vmem:[%s5] sm:$0xf]
          %v1428 = vsel %vm1425, 1, 0
          %v1429 = vsel %vm1426, 1, 0
          %v1430 = vlaneseq
          %v1431 = vshrl.u32 %v1430, 7
          %v1432 = vsub.s32 0, %v1431
          %v1433 = vrot.slane %v1428, %v1432
          %v1434 = vlaneseq
          %v1435 = vshrl.u32 %v1434, 7
          %v1436 = vsub.s32 0, %v1435
          %v1437 = vrot.slane %v1429, %v1436
          %vm1438 = vcmp.eq.s32.totalorder %v1433, 1
          %vm1439 = vcmp.eq.s32.totalorder %v1437, 1
          %1441 = vset.pattern.permute.xlu0 0
          %1442 = vperm.xlu0 %1441, %v1427
          %v1443 = vpop.permute.xlu0 %1442
          %v1446 = vcombine.high %v1424, %v1424
          %v1448 = vsel %vm1438, %v1443, %v1424
          %v1449 = vsel %vm1439, %v1443, %v1446
          %v1452 = vcombine.low %v1448, %v1449
          %1454 = vst [vmem:[%s370] sm:$0xff] %v1452
        $region56: #{tpu_custom_call.1} parent=35 // pred_fallthru
          _
        %s1455 = sand.u32 %s194, 1
        %s1456 = scalar_lea.sflag [#allocation8], %s1455
        %s1457 = sand.u32 %s194, 1
        %s1458 = smul.addr %s1457, 8
        %s1459 = scalar_lea.vmem [#allocation11], %s1458
        // Predicated region
        $region57: #{tpu_custom_call.1} parent=35 // pred_check
          %p1460 = pneg %p204
        $region58: #{tpu_custom_call.1} parent=35 // pred_check_branch
          %1462 = sbr.rel (%p1460) target = $region60
        $region59: #{tpu_custom_call.1} parent=35 // pred_region
          %s1463 = smul.u32 2, %s42
          %s1465 = ssub.s32 128, 128
          %1466 = vsyncadd %s1456, %s1465
          %s1467 = smul.addr %s41, 2
          %s1468 = sadd.s32 %s1463, %s1467
          %s1469 = smul.addr %s1468, 64
          %s1470 = scalar_lea.hbm %s6, %s1469
          %s1472 = sshll.u32 %s1459, 4
          %s1473 = int_to_ptr.vmem [resolvable:$true] %s1472
          %1475 = dma.vmem_to_hbm [thread:$0]  %s1473, 128, %s1470, %s1456
        $region60: #{tpu_custom_call.1} parent=35 // pred_fallthru
          _
      $region36: #{tpu_custom_call.1} parent=5 // pred_fallthru
        _
      %p1476 = scmp.le.s32.totalorder 2, %s31
      // Predicated region
      $region61: #{tpu_custom_call.1} parent=5 // pred_check
        %p1477 = pneg %p1476
      $region62: #{tpu_custom_call.1} parent=5 // pred_check_branch
        %1479 = sbr.rel (%p1477) target = $region64
      $region63: #{tpu_custom_call.1} parent=5 // pred_region
        %s1480 = ssub.s32 %s31, 2
        // Predicated region
        $region65: #{tpu_custom_call.1} parent=63 // pred_check
          %p1481 = pneg %p210
        $region66: #{tpu_custom_call.1} parent=63 // pred_check_branch
          %1483 = sbr.rel (%p1481) target = $region68
        $region67: #{tpu_custom_call.1} parent=63 // pred_region
          %s1484 = sand.u32 %s195, 1
          %s1485 = scalar_lea.sflag [#allocation8], %s1484
          %s1486 = sand.u32 %s195, 1
          %s1487 = smul.addr %s1486, 8
          %s1488 = scalar_lea.vmem [#allocation11], %s1487
          %1489 = dma.done %s1485, 128
        $region68: #{tpu_custom_call.1} parent=63 // pred_fallthru
          _
      $region64: #{tpu_custom_call.1} parent=5 // pred_fallthru
        _
    $region6: #{tpu_custom_call.1} parent=1 // loop_footer
      %s35 = sadd.s32 1, %s31
    $region7: #{tpu_custom_call.1} parent=1 // loop_footer_branch
      %30 = sbr.rel target = $region3
    $region8: #{tpu_custom_call.1} parent=1 // loop_exit
      _
    %1490 = vsyncpa [#allocation7], 1
    %s1491 = scalar_lea.sflag [#allocation7], 1
    %1492 = vsyncpa %s1491, 1
    %1493 = vsyncpa [#allocation10], 1
    %s1494 = scalar_lea.sflag [#allocation10], 1
    %1495 = vsyncpa %s1494, 1
    %1496 = vsyncpa [#allocation8], 1
    %s1497 = scalar_lea.sflag [#allocation8], 1
    %1498 = vsyncpa %s1497, 1

</llo_original>
